<compile_context>
chip_gen: v6e
topology: v6e:2x2x1
jax: 0.10.0
libtpu: 0.0.40
codegen_flags: <defaults>
</compile_context>

<pallas_src>
import functools

import jax
import jax.numpy as jnp
from jax.experimental import pallas as pl
from jax.experimental.pallas import tpu as pltpu


# ----------------------------------------------------------------------------
# Fused Pallas kernel: one batch image per grid step.
# ----------------------------------------------------------------------------
def _res_block_kernel(xr_ref, w1_ref, b1_ref, w2_ref, wr_ref, b2_ref, o_ref,
                      y1p_ref, *, stride, Ho, Wo, C_in, C_out, compute_dtype):
    s = stride
    M = Ho * Wo

    # ---- conv1 (3x3, stride s) + bn1 + relu: 9 shifted matmuls -------------
    # xr holds the zero-padded input in space-to-depth layout:
    #   xr[hq, wq, (rh*s+rw)*C_in + c] = x_pad[s*hq + rh, s*wq + rw, c]
    # so every (kh, kw) tap is a contiguous (Ho, Wo, C_in) window.
    acc1 = jnp.zeros((M, C_out), jnp.float32)
    for kh in range(3):
        for kw in range(3):
            q = (kh % s) * s + (kw % s)
            patch = xr_ref[0,
                           kh // s: kh // s + Ho,
                           kw // s: kw // s + Wo,
                           q * C_in:(q + 1) * C_in]          # (Ho, Wo, C_in)
            acc1 = acc1 + jnp.dot(patch.reshape(M, C_in),
                                  w1_ref[kh * 3 + kw],
                                  preferred_element_type=jnp.float32)
    y1 = jnp.maximum(acc1 + b1_ref[...], 0.0)                # BN scale is in w1

    # ---- stage y1 (zero-padded for conv2's 3x3 halo) in VMEM ---------------
    # Interior at sublane offset 8 -> the store is (8,128)-tile aligned; the
    # halo reads below are unaligned window loads (cheap).
    y1p_ref[...] = jnp.zeros_like(y1p_ref)
    y1p_ref[1:Ho + 1, 8:8 + Wo, :] = y1.reshape(Ho, Wo, C_out)

    # ---- residual: shortcut input x[::s, ::s, :] from the SAME block -------
    hq0 = 1 // s
    q0 = (1 % s) * s + (1 % s)
    xs = xr_ref[0, hq0:hq0 + Ho, hq0:hq0 + Wo, q0 * C_in:(q0 + 1) * C_in]
    acc2 = jnp.dot(xs.reshape(M, C_in), wr_ref[...],
                   preferred_element_type=jnp.float32)

    # ---- conv2 (3x3, stride 1) + bn2: 9 shifted matmuls on staged y1 -------
    for kh in range(3):
        for kw in range(3):
            patch = y1p_ref[kh:kh + Ho, 7 + kw:7 + kw + Wo, :]
            acc2 = acc2 + jnp.dot(patch.astype(compute_dtype).reshape(M, C_out),
                                  w2_ref[kh * 3 + kw],
                                  preferred_element_type=jnp.float32)

    o_ref[0] = (acc2 + b2_ref[...]).astype(o_ref.dtype)


# ----------------------------------------------------------------------------
# JAX-side glue: BN folding, padding + space-to-depth, pallas_call wiring.
# ----------------------------------------------------------------------------
def fold_bn(bn, eps=1e-5):
    gamma, beta, mean, var = bn
    scale = gamma / jnp.sqrt(var + eps)
    bias = beta - mean * scale
    return scale, bias  # each (C,)


def basic_res_block(x_nchw, params, stride, compute_dtype=jnp.bfloat16,
                    out_dtype=jnp.float32):
    """Forward pass of BasicResBlock. Input/output are NCHW float32."""
    N, C_in, H, W = x_nchw.shape
    C_out = params["w1"].shape[0]
    s = int(stride)
    Ho = (H + 2 - 3) // s + 1
    Wo = (W + 2 - 3) // s + 1
    M = Ho * Wo

    # Fold BN (inference mode) into per-position weight matrices + channel bias.
    s1, b1 = fold_bn(params["bn1"])
    s2, b2 = fold_bn(params["bn2"])
    w1 = (jnp.transpose(params["w1"], (2, 3, 1, 0)).reshape(9, C_in, C_out)
          * s1).astype(compute_dtype)
    w2 = (jnp.transpose(params["w2"], (2, 3, 1, 0)).reshape(9, C_out, C_out)
          * s2).astype(compute_dtype)

    needs_conv_res = (s > 1) or (C_in != C_out)
    if needs_conv_res:
        sr, br = fold_bn(params["bn_res"])
        wr = (params["w_res"].reshape(C_out, C_in).T * sr).astype(compute_dtype)
    else:
        wr = jnp.eye(C_in, dtype=compute_dtype)   # identity shortcut, same path
        br = jnp.zeros((C_out,), jnp.float32)
    b1 = b1.reshape(1, C_out).astype(jnp.float32)
    b2r = (b2 + br).reshape(1, C_out).astype(jnp.float32)

    # NCHW -> NHWC, bf16 cast, zero-pad=1, space-to-depth by the conv stride.
    # One fused XLA prep pass; the kernel then reads each activation byte once.
    x = jnp.transpose(x_nchw, (0, 2, 3, 1)).astype(compute_dtype)
    xp = jnp.pad(x, ((0, 0), (1, 1), (1, 1), (0, 0)))
    Hp, Wp = H + 2, W + 2
    Hq, Wq = -(-Hp // s), -(-Wp // s)
    xp = jnp.pad(xp, ((0, 0), (0, Hq * s - Hp), (0, Wq * s - Wp), (0, 0)))
    xr = (xp.reshape(N, Hq, s, Wq, s, C_in)
            .transpose(0, 1, 3, 2, 4, 5)
            .reshape(N, Hq, Wq, s * s * C_in))

    kernel = functools.partial(_res_block_kernel, stride=s, Ho=Ho, Wo=Wo,
                               C_in=C_in, C_out=C_out,
                               compute_dtype=compute_dtype)

    out = pl.pallas_call(
        kernel,
        out_shape=jax.ShapeDtypeStruct((N, M, C_out), out_dtype),
        grid=(N,),
        in_specs=[
            pl.BlockSpec((1, Hq, Wq, s * s * C_in), lambda n: (n, 0, 0, 0)),
            pl.BlockSpec((9, C_in, C_out), lambda n: (0, 0, 0)),
            pl.BlockSpec((1, C_out), lambda n: (0, 0)),
            pl.BlockSpec((9, C_out, C_out), lambda n: (0, 0, 0)),
            pl.BlockSpec((C_in, C_out), lambda n: (0, 0)),
            pl.BlockSpec((1, C_out), lambda n: (0, 0)),
        ],
        out_specs=pl.BlockSpec((1, M, C_out), lambda n: (n, 0, 0)),
        scratch_shapes=[pltpu.VMEM((Ho + 2, Wo + 16, C_out), jnp.float32)],
        compiler_params=pltpu.CompilerParams(
            dimension_semantics=("parallel",),
            vmem_limit_bytes=48 * 1024 * 1024),   # headroom for v7x 64 MiB VMEM
    )(xr, w1, b1, w2, wr, b2r)

    out = out.reshape(N, Ho, Wo, C_out)
    return jnp.transpose(out, (0, 3, 1, 2))       # -> NCHW


# ----------------------------------------------------------------------------
# Pure-JAX reference (lax.conv, f32) to validate the Pallas implementation.
# ----------------------------------------------------------------------------
def ref_forward(x, params, stride):
    def conv(x, w, s, pad):
        return jax.lax.conv_general_dilated(
            x, w, (s, s), [(pad, pad), (pad, pad)],
            dimension_numbers=("NCHW", "OIHW", "NCHW"))

    def bn(x, p, eps=1e-5):
        g, b, m, v = p
        return ((x - m[None, :, None, None])
                / jnp.sqrt(v[None, :, None, None] + eps)
                * g[None, :, None, None] + b[None, :, None, None])

    y = jax.nn.relu(bn(conv(x, params["w1"], stride, 1), params["bn1"]))
    y = bn(conv(y, params["w2"], 1, 1), params["bn2"])
    if "w_res" in params:
        res = bn(conv(x, params["w_res"], stride, 0), params["bn_res"])
    else:
        res = x
    return y + res


# ----------------------------------------------------------------------------
if __name__ == "__main__":
    key = jax.random.PRNGKey(0)
    keys = jax.random.split(key, 16)

    def kaiming(k, shape):
        fan_in = shape[1] * shape[2] * shape[3]
        return jax.random.normal(k, shape, jnp.float32) * jnp.sqrt(2.0 / fan_in)

    def bn_params(k, c):
        k1, k2, k3, k4 = jax.random.split(k, 4)
        gamma = jax.random.uniform(k1, (c,), jnp.float32, 0.5, 1.5)
        beta = jax.random.normal(k2, (c,), jnp.float32) * 0.1
        mean = jax.random.normal(k3, (c,), jnp.float32) * 0.1
        var = jax.random.uniform(k4, (c,), jnp.float32, 0.5, 1.5)
        return (gamma, beta, mean, var)

    def check(x, params, stride):
        ref = ref_forward(x, params, stride)

        # Optimized path: bf16 MXU inputs, f32 accumulation.
        fwd = jax.jit(functools.partial(basic_res_block, stride=stride,
                                        compute_dtype=jnp.bfloat16))
        out = jax.block_until_ready(fwd(x, params))
        assert out.shape == ref.shape, (out.shape, ref.shape)
        rel = float(jnp.linalg.norm(out - ref) / jnp.linalg.norm(ref))
        assert rel < 5e-2, f"bf16 path relative error too large: {rel}"

        # Tight numerical check of the kernel logic with f32 MXU inputs.
        fwd32 = jax.jit(functools.partial(basic_res_block, stride=stride,
                                          compute_dtype=jnp.float32))
        out32 = jax.block_until_ready(fwd32(x, params))
        max_err = float(jnp.max(jnp.abs(out32 - ref)))
        assert jnp.allclose(out32, ref, atol=1e-4, rtol=1e-4), max_err

    # Test 1: downsampling block with 1x1 projection shortcut.
    N, C_in, H, W, C_out, stride = 2, 4, 16, 16, 8, 2
    x = jax.random.normal(keys[0], (N, C_in, H, W), jnp.float32)
    params = {
        "w1": kaiming(keys[1], (C_out, C_in, 3, 3)),
        "w2": kaiming(keys[2], (C_out, C_out, 3, 3)),
        "w_res": kaiming(keys[3], (C_out, C_in, 1, 1)),
        "bn1": bn_params(keys[4], C_out),
        "bn2": bn_params(keys[5], C_out),
        "bn_res": bn_params(keys[6], C_out),
    }
    check(x, params, stride)

    # Test 2: stride-1 block with identity shortcut.
    C2 = 8
    x2 = jax.random.normal(keys[7], (N, C2, H, W), jnp.float32)
    params2 = {
        "w1": kaiming(keys[8], (C2, C2, 3, 3)),
        "w2": kaiming(keys[9], (C2, C2, 3, 3)),
        "bn1": bn_params(keys[10], C2),
        "bn2": bn_params(keys[11], C2),
    }
    check(x2, params2, 1)

    print("KERNEL_OK")
</pallas_src>

<mosaic_0001>
module attributes {stable_mosaic.version = 11 : i64} {
  func.func @_res_block_kernel(%arg0: i32, %arg1: memref<1x9x9x16xbf16, #tpu.memory_space<vmem>>, %arg2: memref<9x4x8xbf16, #tpu.memory_space<vmem>>, %arg3: memref<1x8xf32, #tpu.memory_space<vmem>>, %arg4: memref<9x8x8xbf16, #tpu.memory_space<vmem>>, %arg5: memref<4x8xbf16, #tpu.memory_space<vmem>>, %arg6: memref<1x8xf32, #tpu.memory_space<vmem>>, %arg7: memref<1x64x8xf32, #tpu.memory_space<vmem>>, %arg8: memref<10x24x8xf32, #tpu.memory_space<vmem>>) attributes {dimension_semantics = [#tpu.dimension_semantics<parallel>], iteration_bounds = array<i64: 2>, scalar_prefetch = 0 : i64, scratch_operands = 1 : i64, tpu.core_type = #tpu.core_type<tc>, window_params = [{transform_indices = @transform_0, window_bounds = array<i64: 1, 9, 9, 16>}, {pipeline_mode = #tpu.pipeline_mode<synchronous>, transform_indices = @transform_1, window_bounds = array<i64: 9, 4, 8>}, {pipeline_mode = #tpu.pipeline_mode<synchronous>, transform_indices = @transform_2, window_bounds = array<i64: 1, 8>}, {pipeline_mode = #tpu.pipeline_mode<synchronous>, transform_indices = @transform_3, window_bounds = array<i64: 9, 8, 8>}, {pipeline_mode = #tpu.pipeline_mode<synchronous>, transform_indices = @transform_4, window_bounds = array<i64: 4, 8>}, {pipeline_mode = #tpu.pipeline_mode<synchronous>, transform_indices = @transform_5, window_bounds = array<i64: 1, 8>}, {transform_indices = @transform_6, window_bounds = array<i64: 1, 64, 8>}]} {
    %cst = arith.constant 0.000000e+00 : f32
    %0 = vector.broadcast %cst : f32 to vector<64x8xf32>
    %c0 = arith.constant 0 : index
    %c0_0 = arith.constant 0 : index
    %c0_1 = arith.constant 0 : index
    %c0_2 = arith.constant 0 : index
    %1 = vector.load %arg1[%c0, %c0_0, %c0_1, %c0_2] : memref<1x9x9x16xbf16, #tpu.memory_space<vmem>>, vector<1x8x8x4xbf16>
    %2 = vector.shape_cast %1 : vector<1x8x8x4xbf16> to vector<8x8x4xbf16>
    %3 = vector.shape_cast %2 : vector<8x8x4xbf16> to vector<64x4xbf16>
    %c0_3 = arith.constant 0 : index
    %c0_4 = arith.constant 0 : index
    %c0_5 = arith.constant 0 : index
    %4 = vector.load %arg2[%c0_3, %c0_4, %c0_5] : memref<9x4x8xbf16, #tpu.memory_space<vmem>>, vector<1x4x8xbf16>
    %5 = vector.shape_cast %4 : vector<1x4x8xbf16> to vector<4x8xbf16>
    %cst_6 = arith.constant dense<0.000000e+00> : vector<64x8xf32>
    %6 = tpu.matmul %3, %5, %cst_6 {dimension_numbers = #tpu.dot_dimension_numbers<[1], [0], [0], [1], [0, 0, 1, 1], [], []>} : vector<64x4xbf16>, vector<4x8xbf16>, vector<64x8xf32> -> vector<64x8xf32>
    %7 = arith.addf %0, %6 : vector<64x8xf32>
    %c0_7 = arith.constant 0 : index
    %c0_8 = arith.constant 0 : index
    %c0_9 = arith.constant 0 : index
    %c4 = arith.constant 4 : index
    %8 = vector.load %arg1[%c0_7, %c0_8, %c0_9, %c4] : memref<1x9x9x16xbf16, #tpu.memory_space<vmem>>, vector<1x8x8x4xbf16>
    %9 = vector.shape_cast %8 : vector<1x8x8x4xbf16> to vector<8x8x4xbf16>
    %10 = vector.shape_cast %9 : vector<8x8x4xbf16> to vector<64x4xbf16>
    %c1 = arith.constant 1 : index
    %c0_10 = arith.constant 0 : index
    %c0_11 = arith.constant 0 : index
    %11 = vector.load %arg2[%c1, %c0_10, %c0_11] : memref<9x4x8xbf16, #tpu.memory_space<vmem>>, vector<1x4x8xbf16>
    %12 = vector.shape_cast %11 : vector<1x4x8xbf16> to vector<4x8xbf16>
    %cst_12 = arith.constant dense<0.000000e+00> : vector<64x8xf32>
    %13 = tpu.matmul %10, %12, %cst_12 {dimension_numbers = #tpu.dot_dimension_numbers<[1], [0], [0], [1], [0, 0, 1, 1], [], []>} : vector<64x4xbf16>, vector<4x8xbf16>, vector<64x8xf32> -> vector<64x8xf32>
    %14 = arith.addf %7, %13 : vector<64x8xf32>
    %c0_13 = arith.constant 0 : index
    %c0_14 = arith.constant 0 : index
    %c1_15 = arith.constant 1 : index
    %c0_16 = arith.constant 0 : index
    %15 = vector.load %arg1[%c0_13, %c0_14, %c1_15, %c0_16] : memref<1x9x9x16xbf16, #tpu.memory_space<vmem>>, vector<1x8x8x4xbf16>
    %16 = vector.shape_cast %15 : vector<1x8x8x4xbf16> to vector<8x8x4xbf16>
    %17 = vector.shape_cast %16 : vector<8x8x4xbf16> to vector<64x4xbf16>
    %c2 = arith.constant 2 : index
    %c0_17 = arith.constant 0 : index
    %c0_18 = arith.constant 0 : index
    %18 = vector.load %arg2[%c2, %c0_17, %c0_18] : memref<9x4x8xbf16, #tpu.memory_space<vmem>>, vector<1x4x8xbf16>
    %19 = vector.shape_cast %18 : vector<1x4x8xbf16> to vector<4x8xbf16>
    %cst_19 = arith.constant dense<0.000000e+00> : vector<64x8xf32>
    %20 = tpu.matmul %17, %19, %cst_19 {dimension_numbers = #tpu.dot_dimension_numbers<[1], [0], [0], [1], [0, 0, 1, 1], [], []>} : vector<64x4xbf16>, vector<4x8xbf16>, vector<64x8xf32> -> vector<64x8xf32>
    %21 = arith.addf %14, %20 : vector<64x8xf32>
    %c0_20 = arith.constant 0 : index
    %c0_21 = arith.constant 0 : index
    %c0_22 = arith.constant 0 : index
    %c8 = arith.constant 8 : index
    %22 = vector.load %arg1[%c0_20, %c0_21, %c0_22, %c8] : memref<1x9x9x16xbf16, #tpu.memory_space<vmem>>, vector<1x8x8x4xbf16>
    %23 = vector.shape_cast %22 : vector<1x8x8x4xbf16> to vector<8x8x4xbf16>
    %24 = vector.shape_cast %23 : vector<8x8x4xbf16> to vector<64x4xbf16>
    %c3 = arith.constant 3 : index
    %c0_23 = arith.constant 0 : index
    %c0_24 = arith.constant 0 : index
    %25 = vector.load %arg2[%c3, %c0_23, %c0_24] : memref<9x4x8xbf16, #tpu.memory_space<vmem>>, vector<1x4x8xbf16>
    %26 = vector.shape_cast %25 : vector<1x4x8xbf16> to vector<4x8xbf16>
    %cst_25 = arith.constant dense<0.000000e+00> : vector<64x8xf32>
    %27 = tpu.matmul %24, %26, %cst_25 {dimension_numbers = #tpu.dot_dimension_numbers<[1], [0], [0], [1], [0, 0, 1, 1], [], []>} : vector<64x4xbf16>, vector<4x8xbf16>, vector<64x8xf32> -> vector<64x8xf32>
    %28 = arith.addf %21, %27 : vector<64x8xf32>
    %c0_26 = arith.constant 0 : index
    %c0_27 = arith.constant 0 : index
    %c0_28 = arith.constant 0 : index
    %c12 = arith.constant 12 : index
    %29 = vector.load %arg1[%c0_26, %c0_27, %c0_28, %c12] : memref<1x9x9x16xbf16, #tpu.memory_space<vmem>>, vector<1x8x8x4xbf16>
    %30 = vector.shape_cast %29 : vector<1x8x8x4xbf16> to vector<8x8x4xbf16>
    %31 = vector.shape_cast %30 : vector<8x8x4xbf16> to vector<64x4xbf16>
    %c4_29 = arith.constant 4 : index
    %c0_30 = arith.constant 0 : index
    %c0_31 = arith.constant 0 : index
    %32 = vector.load %arg2[%c4_29, %c0_30, %c0_31] : memref<9x4x8xbf16, #tpu.memory_space<vmem>>, vector<1x4x8xbf16>
    %33 = vector.shape_cast %32 : vector<1x4x8xbf16> to vector<4x8xbf16>
    %cst_32 = arith.constant dense<0.000000e+00> : vector<64x8xf32>
    %34 = tpu.matmul %31, %33, %cst_32 {dimension_numbers = #tpu.dot_dimension_numbers<[1], [0], [0], [1], [0, 0, 1, 1], [], []>} : vector<64x4xbf16>, vector<4x8xbf16>, vector<64x8xf32> -> vector<64x8xf32>
    %35 = arith.addf %28, %34 : vector<64x8xf32>
    %c0_33 = arith.constant 0 : index
    %c0_34 = arith.constant 0 : index
    %c1_35 = arith.constant 1 : index
    %c8_36 = arith.constant 8 : index
    %36 = vector.load %arg1[%c0_33, %c0_34, %c1_35, %c8_36] : memref<1x9x9x16xbf16, #tpu.memory_space<vmem>>, vector<1x8x8x4xbf16>
    %37 = vector.shape_cast %36 : vector<1x8x8x4xbf16> to vector<8x8x4xbf16>
    %38 = vector.shape_cast %37 : vector<8x8x4xbf16> to vector<64x4xbf16>
    %c5 = arith.constant 5 : index
    %c0_37 = arith.constant 0 : index
    %c0_38 = arith.constant 0 : index
    %39 = vector.load %arg2[%c5, %c0_37, %c0_38] : memref<9x4x8xbf16, #tpu.memory_space<vmem>>, vector<1x4x8xbf16>
    %40 = vector.shape_cast %39 : vector<1x4x8xbf16> to vector<4x8xbf16>
    %cst_39 = arith.constant dense<0.000000e+00> : vector<64x8xf32>
    %41 = tpu.matmul %38, %40, %cst_39 {dimension_numbers = #tpu.dot_dimension_numbers<[1], [0], [0], [1], [0, 0, 1, 1], [], []>} : vector<64x4xbf16>, vector<4x8xbf16>, vector<64x8xf32> -> vector<64x8xf32>
    %42 = arith.addf %35, %41 : vector<64x8xf32>
    %c0_40 = arith.constant 0 : index
    %c1_41 = arith.constant 1 : index
    %c0_42 = arith.constant 0 : index
    %c0_43 = arith.constant 0 : index
    %43 = vector.load %arg1[%c0_40, %c1_41, %c0_42, %c0_43] : memref<1x9x9x16xbf16, #tpu.memory_space<vmem>>, vector<1x8x8x4xbf16>
    %44 = vector.shape_cast %43 : vector<1x8x8x4xbf16> to vector<8x8x4xbf16>
    %45 = vector.shape_cast %44 : vector<8x8x4xbf16> to vector<64x4xbf16>
    %c6 = arith.constant 6 : index
    %c0_44 = arith.constant 0 : index
    %c0_45 = arith.constant 0 : index
    %46 = vector.load %arg2[%c6, %c0_44, %c0_45] : memref<9x4x8xbf16, #tpu.memory_space<vmem>>, vector<1x4x8xbf16>
    %47 = vector.shape_cast %46 : vector<1x4x8xbf16> to vector<4x8xbf16>
    %cst_46 = arith.constant dense<0.000000e+00> : vector<64x8xf32>
    %48 = tpu.matmul %45, %47, %cst_46 {dimension_numbers = #tpu.dot_dimension_numbers<[1], [0], [0], [1], [0, 0, 1, 1], [], []>} : vector<64x4xbf16>, vector<4x8xbf16>, vector<64x8xf32> -> vector<64x8xf32>
    %49 = arith.addf %42, %48 : vector<64x8xf32>
    %c0_47 = arith.constant 0 : index
    %c1_48 = arith.constant 1 : index
    %c0_49 = arith.constant 0 : index
    %c4_50 = arith.constant 4 : index
    %50 = vector.load %arg1[%c0_47, %c1_48, %c0_49, %c4_50] : memref<1x9x9x16xbf16, #tpu.memory_space<vmem>>, vector<1x8x8x4xbf16>
    %51 = vector.shape_cast %50 : vector<1x8x8x4xbf16> to vector<8x8x4xbf16>
    %52 = vector.shape_cast %51 : vector<8x8x4xbf16> to vector<64x4xbf16>
    %c7 = arith.constant 7 : index
    %c0_51 = arith.constant 0 : index
    %c0_52 = arith.constant 0 : index
    %53 = vector.load %arg2[%c7, %c0_51, %c0_52] : memref<9x4x8xbf16, #tpu.memory_space<vmem>>, vector<1x4x8xbf16>
    %54 = vector.shape_cast %53 : vector<1x4x8xbf16> to vector<4x8xbf16>
    %cst_53 = arith.constant dense<0.000000e+00> : vector<64x8xf32>
    %55 = tpu.matmul %52, %54, %cst_53 {dimension_numbers = #tpu.dot_dimension_numbers<[1], [0], [0], [1], [0, 0, 1, 1], [], []>} : vector<64x4xbf16>, vector<4x8xbf16>, vector<64x8xf32> -> vector<64x8xf32>
    %56 = arith.addf %49, %55 : vector<64x8xf32>
    %c0_54 = arith.constant 0 : index
    %c1_55 = arith.constant 1 : index
    %c1_56 = arith.constant 1 : index
    %c0_57 = arith.constant 0 : index
    %57 = vector.load %arg1[%c0_54, %c1_55, %c1_56, %c0_57] : memref<1x9x9x16xbf16, #tpu.memory_space<vmem>>, vector<1x8x8x4xbf16>
    %58 = vector.shape_cast %57 : vector<1x8x8x4xbf16> to vector<8x8x4xbf16>
    %59 = vector.shape_cast %58 : vector<8x8x4xbf16> to vector<64x4xbf16>
    %c8_58 = arith.constant 8 : index
    %c0_59 = arith.constant 0 : index
    %c0_60 = arith.constant 0 : index
    %60 = vector.load %arg2[%c8_58, %c0_59, %c0_60] : memref<9x4x8xbf16, #tpu.memory_space<vmem>>, vector<1x4x8xbf16>
    %61 = vector.shape_cast %60 : vector<1x4x8xbf16> to vector<4x8xbf16>
    %cst_61 = arith.constant dense<0.000000e+00> : vector<64x8xf32>
    %62 = tpu.matmul %59, %61, %cst_61 {dimension_numbers = #tpu.dot_dimension_numbers<[1], [0], [0], [1], [0, 0, 1, 1], [], []>} : vector<64x4xbf16>, vector<4x8xbf16>, vector<64x8xf32> -> vector<64x8xf32>
    %63 = arith.addf %56, %62 : vector<64x8xf32>
    %c0_62 = arith.constant 0 : index
    %c0_63 = arith.constant 0 : index
    %64 = vector.load %arg3[%c0_62, %c0_63] : memref<1x8xf32, #tpu.memory_space<vmem>>, vector<1x8xf32>
    %65 = vector.broadcast %64 : vector<1x8xf32> to vector<64x8xf32>
    %66 = arith.addf %63, %65 : vector<64x8xf32>
    %cst_64 = arith.constant 0.000000e+00 : f32
    %67 = vector.broadcast %cst_64 : f32 to vector<64x8xf32>
    %68 = arith.maximumf %66, %67 : vector<64x8xf32>
    %cst_65 = arith.constant 0.000000e+00 : f32
    %69 = vector.broadcast %cst_65 : f32 to vector<10x24x8xf32>
    %c0_66 = arith.constant 0 : index
    %c0_67 = arith.constant 0 : index
    %c0_68 = arith.constant 0 : index
    %70 = vector.load %arg8[%c0_66, %c0_67, %c0_68] : memref<10x24x8xf32, #tpu.memory_space<vmem>>, vector<10x24x8xf32>
    tpu.vector_store %arg8[%c0_66, %c0_67, %c0_68], %69 {strides = array<i32>} : memref<10x24x8xf32, #tpu.memory_space<vmem>>, vector<10x24x8xf32>,
    %71 = vector.shape_cast %68 : vector<64x8xf32> to vector<8x8x8xf32>
    %c1_69 = arith.constant 1 : index
    %c8_70 = arith.constant 8 : index
    %c0_71 = arith.constant 0 : index
    %72 = vector.load %arg8[%c1_69, %c8_70, %c0_71] : memref<10x24x8xf32, #tpu.memory_space<vmem>>, vector<8x8x8xf32>
    tpu.vector_store %arg8[%c1_69, %c8_70, %c0_71], %71 {strides = array<i32>} : memref<10x24x8xf32, #tpu.memory_space<vmem>>, vector<8x8x8xf32>,
    %c0_72 = arith.constant 0 : index
    %c0_73 = arith.constant 0 : index
    %c0_74 = arith.constant 0 : index
    %c12_75 = arith.constant 12 : index
    %73 = vector.load %arg1[%c0_72, %c0_73, %c0_74, %c12_75] : memref<1x9x9x16xbf16, #tpu.memory_space<vmem>>, vector<1x8x8x4xbf16>
    %74 = vector.shape_cast %73 : vector<1x8x8x4xbf16> to vector<8x8x4xbf16>
    %75 = vector.shape_cast %74 : vector<8x8x4xbf16> to vector<64x4xbf16>
    %c0_76 = arith.constant 0 : index
    %c0_77 = arith.constant 0 : index
    %76 = vector.load %arg5[%c0_76, %c0_77] : memref<4x8xbf16, #tpu.memory_space<vmem>>, vector<4x8xbf16>
    %cst_78 = arith.constant dense<0.000000e+00> : vector<64x8xf32>
    %77 = tpu.matmul %75, %76, %cst_78 {dimension_numbers = #tpu.dot_dimension_numbers<[1], [0], [0], [1], [0, 0, 1, 1], [], []>} : vector<64x4xbf16>, vector<4x8xbf16>, vector<64x8xf32> -> vector<64x8xf32>
    %c0_79 = arith.constant 0 : index
    %c7_80 = arith.constant 7 : index
    %c0_81 = arith.constant 0 : index
    %78 = vector.load %arg8[%c0_79, %c7_80, %c0_81] : memref<10x24x8xf32, #tpu.memory_space<vmem>>, vector<8x8x8xf32>
    %79 = arith.truncf %78 : vector<8x8x8xf32> to vector<8x8x8xbf16>
    %80 = vector.shape_cast %79 : vector<8x8x8xbf16> to vector<64x8xbf16>
    %c0_82 = arith.constant 0 : index
    %c0_83 = arith.constant 0 : index
    %c0_84 = arith.constant 0 : index
    %81 = vector.load %arg4[%c0_82, %c0_83, %c0_84] : memref<9x8x8xbf16, #tpu.memory_space<vmem>>, vector<1x8x8xbf16>
    %82 = vector.shape_cast %81 : vector<1x8x8xbf16> to vector<8x8xbf16>
    %cst_85 = arith.constant dense<0.000000e+00> : vector<64x8xf32>
    %83 = tpu.matmul %80, %82, %cst_85 {dimension_numbers = #tpu.dot_dimension_numbers<[1], [0], [0], [1], [0, 0, 1, 1], [], []>} : vector<64x8xbf16>, vector<8x8xbf16>, vector<64x8xf32> -> vector<64x8xf32>
    %84 = arith.addf %77, %83 : vector<64x8xf32>
    %c0_86 = arith.constant 0 : index
    %c8_87 = arith.constant 8 : index
    %c0_88 = arith.constant 0 : index
    %85 = vector.load %arg8[%c0_86, %c8_87, %c0_88] : memref<10x24x8xf32, #tpu.memory_space<vmem>>, vector<8x8x8xf32>
    %86 = arith.truncf %85 : vector<8x8x8xf32> to vector<8x8x8xbf16>
    %87 = vector.shape_cast %86 : vector<8x8x8xbf16> to vector<64x8xbf16>
    %c1_89 = arith.constant 1 : index
    %c0_90 = arith.constant 0 : index
    %c0_91 = arith.constant 0 : index
    %88 = vector.load %arg4[%c1_89, %c0_90, %c0_91] : memref<9x8x8xbf16, #tpu.memory_space<vmem>>, vector<1x8x8xbf16>
    %89 = vector.shape_cast %88 : vector<1x8x8xbf16> to vector<8x8xbf16>
    %cst_92 = arith.constant dense<0.000000e+00> : vector<64x8xf32>
    %90 = tpu.matmul %87, %89, %cst_92 {dimension_numbers = #tpu.dot_dimension_numbers<[1], [0], [0], [1], [0, 0, 1, 1], [], []>} : vector<64x8xbf16>, vector<8x8xbf16>, vector<64x8xf32> -> vector<64x8xf32>
    %91 = arith.addf %84, %90 : vector<64x8xf32>
    %c0_93 = arith.constant 0 : index
    %c9 = arith.constant 9 : index
    %c0_94 = arith.constant 0 : index
    %92 = vector.load %arg8[%c0_93, %c9, %c0_94] : memref<10x24x8xf32, #tpu.memory_space<vmem>>, vector<8x8x8xf32>
    %93 = arith.truncf %92 : vector<8x8x8xf32> to vector<8x8x8xbf16>
    %94 = vector.shape_cast %93 : vector<8x8x8xbf16> to vector<64x8xbf16>
    %c2_95 = arith.constant 2 : index
    %c0_96 = arith.constant 0 : index
    %c0_97 = arith.constant 0 : index
    %95 = vector.load %arg4[%c2_95, %c0_96, %c0_97] : memref<9x8x8xbf16, #tpu.memory_space<vmem>>, vector<1x8x8xbf16>
    %96 = vector.shape_cast %95 : vector<1x8x8xbf16> to vector<8x8xbf16>
    %cst_98 = arith.constant dense<0.000000e+00> : vector<64x8xf32>
    %97 = tpu.matmul %94, %96, %cst_98 {dimension_numbers = #tpu.dot_dimension_numbers<[1], [0], [0], [1], [0, 0, 1, 1], [], []>} : vector<64x8xbf16>, vector<8x8xbf16>, vector<64x8xf32> -> vector<64x8xf32>
    %98 = arith.addf %91, %97 : vector<64x8xf32>
    %c1_99 = arith.constant 1 : index
    %c7_100 = arith.constant 7 : index
    %c0_101 = arith.constant 0 : index
    %99 = vector.load %arg8[%c1_99, %c7_100, %c0_101] : memref<10x24x8xf32, #tpu.memory_space<vmem>>, vector<8x8x8xf32>
    %100 = arith.truncf %99 : vector<8x8x8xf32> to vector<8x8x8xbf16>
    %101 = vector.shape_cast %100 : vector<8x8x8xbf16> to vector<64x8xbf16>
    %c3_102 = arith.constant 3 : index
    %c0_103 = arith.constant 0 : index
    %c0_104 = arith.constant 0 : index
    %102 = vector.load %arg4[%c3_102, %c0_103, %c0_104] : memref<9x8x8xbf16, #tpu.memory_space<vmem>>, vector<1x8x8xbf16>
    %103 = vector.shape_cast %102 : vector<1x8x8xbf16> to vector<8x8xbf16>
    %cst_105 = arith.constant dense<0.000000e+00> : vector<64x8xf32>
    %104 = tpu.matmul %101, %103, %cst_105 {dimension_numbers = #tpu.dot_dimension_numbers<[1], [0], [0], [1], [0, 0, 1, 1], [], []>} : vector<64x8xbf16>, vector<8x8xbf16>, vector<64x8xf32> -> vector<64x8xf32>
    %105 = arith.addf %98, %104 : vector<64x8xf32>
    %c1_106 = arith.constant 1 : index
    %c8_107 = arith.constant 8 : index
    %c0_108 = arith.constant 0 : index
    %106 = vector.load %arg8[%c1_106, %c8_107, %c0_108] : memref<10x24x8xf32, #tpu.memory_space<vmem>>, vector<8x8x8xf32>
    %107 = arith.truncf %106 : vector<8x8x8xf32> to vector<8x8x8xbf16>
    %108 = vector.shape_cast %107 : vector<8x8x8xbf16> to vector<64x8xbf16>
    %c4_109 = arith.constant 4 : index
    %c0_110 = arith.constant 0 : index
    %c0_111 = arith.constant 0 : index
    %109 = vector.load %arg4[%c4_109, %c0_110, %c0_111] : memref<9x8x8xbf16, #tpu.memory_space<vmem>>, vector<1x8x8xbf16>
    %110 = vector.shape_cast %109 : vector<1x8x8xbf16> to vector<8x8xbf16>
    %cst_112 = arith.constant dense<0.000000e+00> : vector<64x8xf32>
    %111 = tpu.matmul %108, %110, %cst_112 {dimension_numbers = #tpu.dot_dimension_numbers<[1], [0], [0], [1], [0, 0, 1, 1], [], []>} : vector<64x8xbf16>, vector<8x8xbf16>, vector<64x8xf32> -> vector<64x8xf32>
    %112 = arith.addf %105, %111 : vector<64x8xf32>
    %c1_113 = arith.constant 1 : index
    %c9_114 = arith.constant 9 : index
    %c0_115 = arith.constant 0 : index
    %113 = vector.load %arg8[%c1_113, %c9_114, %c0_115] : memref<10x24x8xf32, #tpu.memory_space<vmem>>, vector<8x8x8xf32>
    %114 = arith.truncf %113 : vector<8x8x8xf32> to vector<8x8x8xbf16>
    %115 = vector.shape_cast %114 : vector<8x8x8xbf16> to vector<64x8xbf16>
    %c5_116 = arith.constant 5 : index
    %c0_117 = arith.constant 0 : index
    %c0_118 = arith.constant 0 : index
    %116 = vector.load %arg4[%c5_116, %c0_117, %c0_118] : memref<9x8x8xbf16, #tpu.memory_space<vmem>>, vector<1x8x8xbf16>
    %117 = vector.shape_cast %116 : vector<1x8x8xbf16> to vector<8x8xbf16>
    %cst_119 = arith.constant dense<0.000000e+00> : vector<64x8xf32>
    %118 = tpu.matmul %115, %117, %cst_119 {dimension_numbers = #tpu.dot_dimension_numbers<[1], [0], [0], [1], [0, 0, 1, 1], [], []>} : vector<64x8xbf16>, vector<8x8xbf16>, vector<64x8xf32> -> vector<64x8xf32>
    %119 = arith.addf %112, %118 : vector<64x8xf32>
    %c2_120 = arith.constant 2 : index
    %c7_121 = arith.constant 7 : index
    %c0_122 = arith.constant 0 : index
    %120 = vector.load %arg8[%c2_120, %c7_121, %c0_122] : memref<10x24x8xf32, #tpu.memory_space<vmem>>, vector<8x8x8xf32>
    %121 = arith.truncf %120 : vector<8x8x8xf32> to vector<8x8x8xbf16>
    %122 = vector.shape_cast %121 : vector<8x8x8xbf16> to vector<64x8xbf16>
    %c6_123 = arith.constant 6 : index
    %c0_124 = arith.constant 0 : index
    %c0_125 = arith.constant 0 : index
    %123 = vector.load %arg4[%c6_123, %c0_124, %c0_125] : memref<9x8x8xbf16, #tpu.memory_space<vmem>>, vector<1x8x8xbf16>
    %124 = vector.shape_cast %123 : vector<1x8x8xbf16> to vector<8x8xbf16>
    %cst_126 = arith.constant dense<0.000000e+00> : vector<64x8xf32>
    %125 = tpu.matmul %122, %124, %cst_126 {dimension_numbers = #tpu.dot_dimension_numbers<[1], [0], [0], [1], [0, 0, 1, 1], [], []>} : vector<64x8xbf16>, vector<8x8xbf16>, vector<64x8xf32> -> vector<64x8xf32>
    %126 = arith.addf %119, %125 : vector<64x8xf32>
    %c2_127 = arith.constant 2 : index
    %c8_128 = arith.constant 8 : index
    %c0_129 = arith.constant 0 : index
    %127 = vector.load %arg8[%c2_127, %c8_128, %c0_129] : memref<10x24x8xf32, #tpu.memory_space<vmem>>, vector<8x8x8xf32>
    %128 = arith.truncf %127 : vector<8x8x8xf32> to vector<8x8x8xbf16>
    %129 = vector.shape_cast %128 : vector<8x8x8xbf16> to vector<64x8xbf16>
    %c7_130 = arith.constant 7 : index
    %c0_131 = arith.constant 0 : index
    %c0_132 = arith.constant 0 : index
    %130 = vector.load %arg4[%c7_130, %c0_131, %c0_132] : memref<9x8x8xbf16, #tpu.memory_space<vmem>>, vector<1x8x8xbf16>
    %131 = vector.shape_cast %130 : vector<1x8x8xbf16> to vector<8x8xbf16>
    %cst_133 = arith.constant dense<0.000000e+00> : vector<64x8xf32>
    %132 = tpu.matmul %129, %131, %cst_133 {dimension_numbers = #tpu.dot_dimension_numbers<[1], [0], [0], [1], [0, 0, 1, 1], [], []>} : vector<64x8xbf16>, vector<8x8xbf16>, vector<64x8xf32> -> vector<64x8xf32>
    %133 = arith.addf %126, %132 : vector<64x8xf32>
    %c2_134 = arith.constant 2 : index
    %c9_135 = arith.constant 9 : index
    %c0_136 = arith.constant 0 : index
    %134 = vector.load %arg8[%c2_134, %c9_135, %c0_136] : memref<10x24x8xf32, #tpu.memory_space<vmem>>, vector<8x8x8xf32>
    %135 = arith.truncf %134 : vector<8x8x8xf32> to vector<8x8x8xbf16>
    %136 = vector.shape_cast %135 : vector<8x8x8xbf16> to vector<64x8xbf16>
    %c8_137 = arith.constant 8 : index
    %c0_138 = arith.constant 0 : index
    %c0_139 = arith.constant 0 : index
    %137 = vector.load %arg4[%c8_137, %c0_138, %c0_139] : memref<9x8x8xbf16, #tpu.memory_space<vmem>>, vector<1x8x8xbf16>
    %138 = vector.shape_cast %137 : vector<1x8x8xbf16> to vector<8x8xbf16>
    %cst_140 = arith.constant dense<0.000000e+00> : vector<64x8xf32>
    %139 = tpu.matmul %136, %138, %cst_140 {dimension_numbers = #tpu.dot_dimension_numbers<[1], [0], [0], [1], [0, 0, 1, 1], [], []>} : vector<64x8xbf16>, vector<8x8xbf16>, vector<64x8xf32> -> vector<64x8xf32>
    %140 = arith.addf %133, %139 : vector<64x8xf32>
    %c0_141 = arith.constant 0 : index
    %c0_142 = arith.constant 0 : index
    %141 = vector.load %arg6[%c0_141, %c0_142] : memref<1x8xf32, #tpu.memory_space<vmem>>, vector<1x8xf32>
    %142 = vector.broadcast %141 : vector<1x8xf32> to vector<64x8xf32>
    %143 = arith.addf %140, %142 : vector<64x8xf32>
    %c0_143 = arith.constant 0 : index
    %c0_144 = arith.constant 0 : index
    %c0_145 = arith.constant 0 : index
    %144 = vector.load %arg7[%c0_143, %c0_144, %c0_145] : memref<1x64x8xf32, #tpu.memory_space<vmem>>, vector<1x64x8xf32>
    %145 = vector.shape_cast %144 : vector<1x64x8xf32> to vector<64x8xf32>
    %146 = vector.shape_cast %143 : vector<64x8xf32> to vector<1x64x8xf32>
    tpu.vector_store %arg7[%c0_143, %c0_144, %c0_145], %146 {strides = array<i32>} : memref<1x64x8xf32, #tpu.memory_space<vmem>>, vector<1x64x8xf32>,
    return
  }
  func.func @transform_0(%arg0: i32) -> (i32, i32, i32, i32) {
    %c0_i32 = arith.constant 0 : i32
    %c0_i32_0 = arith.constant 0 : i32
    %c0_i32_1 = arith.constant 0 : i32
    %c0_i32_2 = arith.constant 0 : i32
    return %arg0, %c0_i32, %c0_i32_0, %c0_i32_1 : i32, i32, i32, i32
  }
  func.func @transform_1(%arg0: i32) -> (i32, i32, i32) {
    %c0_i32 = arith.constant 0 : i32
    %c0_i32_0 = arith.constant 0 : i32
    %c0_i32_1 = arith.constant 0 : i32
    %c0_i32_2 = arith.constant 0 : i32
    return %c0_i32, %c0_i32_0, %c0_i32_1 : i32, i32, i32
  }
  func.func @transform_2(%arg0: i32) -> (i32, i32) {
    %c0_i32 = arith.constant 0 : i32
    %c0_i32_0 = arith.constant 0 : i32
    %c0_i32_1 = arith.constant 0 : i32
    return %c0_i32, %c0_i32_0 : i32, i32
  }
  func.func @transform_3(%arg0: i32) -> (i32, i32, i32) {
    %c0_i32 = arith.constant 0 : i32
    %c0_i32_0 = arith.constant 0 : i32
    %c0_i32_1 = arith.constant 0 : i32
    %c0_i32_2 = arith.constant 0 : i32
    return %c0_i32, %c0_i32_0, %c0_i32_1 : i32, i32, i32
  }
  func.func @transform_4(%arg0: i32) -> (i32, i32) {
    %c0_i32 = arith.constant 0 : i32
    %c0_i32_0 = arith.constant 0 : i32
    %c0_i32_1 = arith.constant 0 : i32
    return %c0_i32, %c0_i32_0 : i32, i32
  }
  func.func @transform_5(%arg0: i32) -> (i32, i32) {
    %c0_i32 = arith.constant 0 : i32
    %c0_i32_0 = arith.constant 0 : i32
    %c0_i32_1 = arith.constant 0 : i32
    return %c0_i32, %c0_i32_0 : i32, i32
  }
  func.func @transform_6(%arg0: i32) -> (i32, i32, i32) {
    %c0_i32 = arith.constant 0 : i32
    %c0_i32_0 = arith.constant 0 : i32
    %c0_i32_1 = arith.constant 0 : i32
    return %arg0, %c0_i32, %c0_i32_0 : i32, i32, i32
  }
}

</mosaic_0001>

<llo_original>
// kernel: basic_res_block.1
$region0: #{basic_res_block.1}
  #allocation0 [shape = 'u32[]', space=smem, size = 0x4, offset = 0x4, fixed_abs, tag = 'smem constant byte address 0x4 - core index']
  #allocation1 [shape = 'u32[144,128]{1,0:T(1,128)}', space=vmem, size = 0x12000, scoped, tag = 'internal scratch']
  #allocation2 [shape = 'f32[10,24,8]{2,1,0:T(8,128)}', space=vmem, size = 0x1e000, scoped, tag = 'scratch operand']
  %s0 = inlined_call_operand.vmem [shape: bf16[2,9,9,16], index: 0, kind: input, shape index: {}]
  %s1 = inlined_call_operand.vmem [shape: bf16[9,4,8], index: 1, kind: input, shape index: {}]
  %s2 = inlined_call_operand.vmem [shape: f32[1,8], index: 2, kind: input, shape index: {}]
  %s3 = inlined_call_operand.vmem [shape: bf16[9,8,8], index: 3, kind: input, shape index: {}]
  %s4 = inlined_call_operand.vmem [shape: bf16[4,8], index: 4, kind: input, shape index: {}]
  %s5 = inlined_call_operand.vmem [shape: f32[1,8], index: 5, kind: input, shape index: {}]
  %s6 = inlined_call_operand.vmem [shape: f32[2,64,8], index: 6, kind: output, shape index: {}]
  %s7 = sld [smem:[#allocation0]]
  $region57: #{basic_res_block.1} parent=0
    _
  %s9 = ssub.s32 1, %s7
  %s10 = scalar_select 0, %s9, %s7
  loop: start=0, step=1, limit=4
  $region2: #{basic_res_block.1} parent=0 // loop_pre_header
    _
  $region3: #{basic_res_block.1} parent=0 // loop_header
    %s12 = sphi 0, %s16
    %p13 = scmp.ge.s32.totalorder %s12, 4
    %s22 = sphi 0, %s24
    %s25 = sphi 0, %s22
    %s26 = sphi 0, %s25
    %s42 = sphi 0, %s26
    %s46 = sphi 0, %s46
    %s48 = sphi 0, %s46
    %s49 = sphi 0, %s48
    %s63 = sphi 0, %s49
    %s67 = sphi 0, %s67
    %s69 = sphi 0, %s67
    %s70 = sphi 0, %s69
    %s84 = sphi 0, %s70
    %s88 = sphi 0, %s88
    %s90 = sphi 0, %s88
    %s91 = sphi 0, %s90
    %s105 = sphi 0, %s91
    %s109 = sphi 0, %s109
    %s111 = sphi 0, %s109
    %s112 = sphi 0, %s111
    %s126 = sphi 0, %s112
    %s130 = sphi 0, %s130
    %s132 = sphi 0, %s130
    %s133 = sphi 0, %s132
    %s147 = sphi 0, %s133
    %s153 = sphi 0, %s155
    %s156 = sphi 0, %s153
    %s157 = sphi 0, %s156
    %s173 = sphi 0, %s157
  $region4: #{basic_res_block.1} parent=0 // loop_header_branch
    %15 = sbr.rel (%p13) target = $region8
  $region5: #{basic_res_block.1} parent=0 // loop_body
    %s17 = ssub.s32 %s12, 1
    %s18 = ssub.s32 %s12, 2
    %s19 = sadd.s32 %s12, 1
    %s20 = ssub.s32 %s12, %s19
    %p21 = scmp.eq.s32.totalorder %s20, 0
    %s23 = sadd.s32 %s22, 1
    %s24 = scalar_select %p21, %s22, %s23
    %p27 = pneg %p21
    %p28 = scmp.eq.s32.totalorder %s12, 1
    %p29 = por %p27, %p28
    %p30 = scmp.ne.s32.totalorder %s22, %s25
    %p31 = scmp.eq.s32.totalorder %s12, 0
    %p32 = por %p30, %p31
    %p33 = scmp.ne.s32.totalorder %s22, %s25
    %p34 = scmp.eq.s32.totalorder %s17, 1
    %p35 = por %p33, %p34
    %p36 = scmp.ne.s32.totalorder %s25, %s26
    %p37 = scmp.eq.s32.totalorder %s17, 0
    %p38 = por %p36, %p37
    %p39 = scmp.ne.s32.totalorder %s25, %s26
    %p40 = scmp.eq.s32.totalorder %s18, 1
    %p41 = por %p39, %p40
    %p43 = scmp.ne.s32.totalorder %s26, %s42
    %p44 = scmp.eq.s32.totalorder %s18, 0
    %p45 = por %p43, %p44
    %s47 = sadd.s32 %s46, 1
    %p50 = scmp.eq.s32.totalorder %s12, 1
    %p51 = scmp.ne.s32.totalorder %s46, %s48
    %p52 = scmp.eq.s32.totalorder %s12, 0
    %p53 = por %p51, %p52
    %p54 = scmp.ne.s32.totalorder %s46, %s48
    %p55 = scmp.eq.s32.totalorder %s17, 1
    %p56 = por %p54, %p55
    %p57 = scmp.ne.s32.totalorder %s48, %s49
    %p58 = scmp.eq.s32.totalorder %s17, 0
    %p59 = por %p57, %p58
    %p60 = scmp.ne.s32.totalorder %s48, %s49
    %p61 = scmp.eq.s32.totalorder %s18, 1
    %p62 = por %p60, %p61
    %p64 = scmp.ne.s32.totalorder %s49, %s63
    %p65 = scmp.eq.s32.totalorder %s18, 0
    %p66 = por %p64, %p65
    %s68 = sadd.s32 %s67, 1
    %p71 = scmp.eq.s32.totalorder %s12, 1
    %p72 = scmp.ne.s32.totalorder %s67, %s69
    %p73 = scmp.eq.s32.totalorder %s12, 0
    %p74 = por %p72, %p73
    %p75 = scmp.ne.s32.totalorder %s67, %s69
    %p76 = scmp.eq.s32.totalorder %s17, 1
    %p77 = por %p75, %p76
    %p78 = scmp.ne.s32.totalorder %s69, %s70
    %p79 = scmp.eq.s32.totalorder %s17, 0
    %p80 = por %p78, %p79
    %p81 = scmp.ne.s32.totalorder %s69, %s70
    %p82 = scmp.eq.s32.totalorder %s18, 1
    %p83 = por %p81, %p82
    %p85 = scmp.ne.s32.totalorder %s70, %s84
    %p86 = scmp.eq.s32.totalorder %s18, 0
    %p87 = por %p85, %p86
    %s89 = sadd.s32 %s88, 1
    %p92 = scmp.eq.s32.totalorder %s12, 1
    %p93 = scmp.ne.s32.totalorder %s88, %s90
    %p94 = scmp.eq.s32.totalorder %s12, 0
    %p95 = por %p93, %p94
    %p96 = scmp.ne.s32.totalorder %s88, %s90
    %p97 = scmp.eq.s32.totalorder %s17, 1
    %p98 = por %p96, %p97
    %p99 = scmp.ne.s32.totalorder %s90, %s91
    %p100 = scmp.eq.s32.totalorder %s17, 0
    %p101 = por %p99, %p100
    %p102 = scmp.ne.s32.totalorder %s90, %s91
    %p103 = scmp.eq.s32.totalorder %s18, 1
    %p104 = por %p102, %p103
    %p106 = scmp.ne.s32.totalorder %s91, %s105
    %p107 = scmp.eq.s32.totalorder %s18, 0
    %p108 = por %p106, %p107
    %s110 = sadd.s32 %s109, 1
    %p113 = scmp.eq.s32.totalorder %s12, 1
    %p114 = scmp.ne.s32.totalorder %s109, %s111
    %p115 = scmp.eq.s32.totalorder %s12, 0
    %p116 = por %p114, %p115
    %p117 = scmp.ne.s32.totalorder %s109, %s111
    %p118 = scmp.eq.s32.totalorder %s17, 1
    %p119 = por %p117, %p118
    %p120 = scmp.ne.s32.totalorder %s111, %s112
    %p121 = scmp.eq.s32.totalorder %s17, 0
    %p122 = por %p120, %p121
    %p123 = scmp.ne.s32.totalorder %s111, %s112
    %p124 = scmp.eq.s32.totalorder %s18, 1
    %p125 = por %p123, %p124
    %p127 = scmp.ne.s32.totalorder %s112, %s126
    %p128 = scmp.eq.s32.totalorder %s18, 0
    %p129 = por %p127, %p128
    %s131 = sadd.s32 %s130, 1
    %p134 = scmp.eq.s32.totalorder %s12, 1
    %p135 = scmp.ne.s32.totalorder %s130, %s132
    %p136 = scmp.eq.s32.totalorder %s12, 0
    %p137 = por %p135, %p136
    %p138 = scmp.ne.s32.totalorder %s130, %s132
    %p139 = scmp.eq.s32.totalorder %s17, 1
    %p140 = por %p138, %p139
    %p141 = scmp.ne.s32.totalorder %s132, %s133
    %p142 = scmp.eq.s32.totalorder %s17, 0
    %p143 = por %p141, %p142
    %p144 = scmp.ne.s32.totalorder %s132, %s133
    %p145 = scmp.eq.s32.totalorder %s18, 1
    %p146 = por %p144, %p145
    %p148 = scmp.ne.s32.totalorder %s133, %s147
    %p149 = scmp.eq.s32.totalorder %s18, 0
    %p150 = por %p148, %p149
    %s151 = ssub.s32 %s12, %s19
    %p152 = scmp.eq.s32.totalorder %s151, 0
    %s154 = sadd.s32 %s153, 1
    %s155 = scalar_select %p152, %s153, %s154
    %p158 = pneg %p152
    %p159 = scmp.eq.s32.totalorder %s12, 1
    %p160 = por %p158, %p159
    %p161 = scmp.ne.s32.totalorder %s153, %s156
    %p162 = scmp.eq.s32.totalorder %s12, 0
    %p163 = por %p161, %p162
    %p164 = scmp.ne.s32.totalorder %s153, %s156
    %p165 = scmp.eq.s32.totalorder %s17, 1
    %p166 = por %p164, %p165
    %p167 = scmp.ne.s32.totalorder %s156, %s157
    %p168 = scmp.eq.s32.totalorder %s17, 0
    %p169 = por %p167, %p168
    %p170 = scmp.ne.s32.totalorder %s156, %s157
    %p171 = scmp.eq.s32.totalorder %s18, 1
    %p172 = por %p170, %p171
    %p174 = scmp.ne.s32.totalorder %s157, %s173
    %p175 = scmp.eq.s32.totalorder %s18, 0
    %p176 = por %p174, %p175
    %p177 = scmp.le.s32.totalorder 1, %s12
    %p178 = scmp.lt.s32.totalorder %s12, 3
    %p179 = pnand %p177, %p178
    %p180 = pneg %p179
    // Predicated region
    $region9: #{basic_res_block.1} parent=5 // pred_check
      _
    $region10: #{basic_res_block.1} parent=5 // pred_check_branch
      %182 = sbr.rel (%p179) target = $region12
    $region11: #{basic_res_block.1} parent=5 // pred_region
      %s183 = ssub.s32 %s12, 1
      // Predicated region
      $region13: #{basic_res_block.1} parent=11 // pred_check
        %p184 = pneg %p59
      $region14: #{basic_res_block.1} parent=11 // pred_check_branch
        %186 = sbr.rel (%p184) target = $region16
      $region15: #{basic_res_block.1} parent=11 // pred_region
        _
      $region16: #{basic_res_block.1} parent=11 // pred_fallthru
        _
      // Predicated region
      $region17: #{basic_res_block.1} parent=11 // pred_check
        %p187 = pneg %p80
      $region18: #{basic_res_block.1} parent=11 // pred_check_branch
        %189 = sbr.rel (%p187) target = $region20
      $region19: #{basic_res_block.1} parent=11 // pred_region
        _
      $region20: #{basic_res_block.1} parent=11 // pred_fallthru
        _
      // Predicated region
      $region21: #{basic_res_block.1} parent=11 // pred_check
        %p190 = pneg %p101
      $region22: #{basic_res_block.1} parent=11 // pred_check_branch
        %192 = sbr.rel (%p190) target = $region24
      $region23: #{basic_res_block.1} parent=11 // pred_region
        _
      $region24: #{basic_res_block.1} parent=11 // pred_fallthru
        _
      // Predicated region
      $region25: #{basic_res_block.1} parent=11 // pred_check
        %p193 = pneg %p122
      $region26: #{basic_res_block.1} parent=11 // pred_check_branch
        %195 = sbr.rel (%p193) target = $region28
      $region27: #{basic_res_block.1} parent=11 // pred_region
        _
      $region28: #{basic_res_block.1} parent=11 // pred_fallthru
        _
      // Predicated region
      $region29: #{basic_res_block.1} parent=11 // pred_check
        %p196 = pneg %p143
      $region30: #{basic_res_block.1} parent=11 // pred_check_branch
        %198 = sbr.rel (%p196) target = $region32
      $region31: #{basic_res_block.1} parent=11 // pred_region
        _
      $region32: #{basic_res_block.1} parent=11 // pred_fallthru
        _
    $region12: #{basic_res_block.1} parent=5 // pred_fallthru
      _
    %p199 = scmp.lt.s32.totalorder %s12, 2
    // Predicated region
    $region33: #{basic_res_block.1} parent=5 // pred_check
      %p200 = pneg %p199
    $region34: #{basic_res_block.1} parent=5 // pred_check_branch
      %202 = sbr.rel (%p200) target = $region36
    $region35: #{basic_res_block.1} parent=5 // pred_region
      // Predicated region
      $region37: #{basic_res_block.1} parent=35 // pred_check
        %p203 = pneg %p32
      $region38: #{basic_res_block.1} parent=35 // pred_check_branch
        %205 = sbr.rel (%p203) target = $region40
      $region39: #{basic_res_block.1} parent=35 // pred_region
        %p206 = scmp.lt.s32.totalorder %s12, 1
        %s207 = scalar_select %p206, %s12, 1
        %s208 = smul.addr %s207, 18
        %s209 = smul.addr %s208, 4
        %s210 = scalar_lea.vmem %s0, %s209
      $region40: #{basic_res_block.1} parent=35 // pred_fallthru
        _
    $region36: #{basic_res_block.1} parent=5 // pred_fallthru
      _
    %p211 = scmp.le.s32.totalorder 1, %s12
    %p212 = scmp.lt.s32.totalorder %s12, 3
    %p213 = pnand %p211, %p212
    %p214 = pneg %p213
    // Predicated region
    $region41: #{basic_res_block.1} parent=5 // pred_check
      _
    $region42: #{basic_res_block.1} parent=5 // pred_check_branch
      %216 = sbr.rel (%p213) target = $region44
    $region43: #{basic_res_block.1} parent=5 // pred_region
      %s217 = ssub.s32 %s12, 1
      %p218 = scmp.lt.s32.totalorder %s17, 1
      %s219 = scalar_select %p218, %s17, 1
      %s220 = smul.addr %s219, 18
      %s221 = smul.addr %s220, 4
      %s222 = scalar_lea.vmem %s0, %s221
      %p223 = pneg %p38
      %p224 = pneg %p35
      %p225 = pneg %p59
      %p226 = pneg %p56
      %p227 = pneg %p80
      %p228 = pneg %p77
      %p229 = pneg %p101
      %p230 = pneg %p98
      %p231 = pneg %p122
      %p232 = pneg %p119
      %p233 = pneg %p143
      %p234 = pneg %p140
      %p235 = pneg %p169
      %p236 = pneg %p166
      %p237 = scmp.lt.s32.totalorder %s17, 1
      %s238 = scalar_select %p237, %s17, 1
      %s239 = smul.addr %s238, 8
      %s240 = smul.addr %s239, 8
      %s241 = scalar_lea.vmem %s6, %s240
      %p242 = scmp.lt.s32.totalorder %s17, 1
      %s243 = scalar_select %p242, %s17, 1
      %s244 = smul.addr %s243, 18
      %s245 = smul.addr %s244, 4
      %s246 = scalar_lea.vmem %s0, %s245
      %p247 = scmp.lt.s32.totalorder %s17, 1
      %s248 = scalar_select %p247, %s17, 1
      %s249 = smul.addr %s248, 8
      %s250 = smul.addr %s249, 8
      %s251 = scalar_lea.vmem %s6, %s250
      %v253 = vld [vmem:[%s246] sm:$0xf]
      %v254 = vld [vmem:[%s246 + $0x8] sm:$0xf]
      %v255 = vld [vmem:[%s246 + $0x10] sm:$0xf]
      %v256 = vld [vmem:[%s246 + $0x18] sm:$0xf]
      %v257 = vld [vmem:[%s246 + $0x20] sm:$0xf]
      %v258 = vld [vmem:[%s246 + $0x28] sm:$0xf]
      %v259 = vld [vmem:[%s246 + $0x30] sm:$0xf]
      %v260 = vld [vmem:[%s246 + $0x38] sm:$0xf]
      %v261 = vld [vmem:[%s1] sm:$0x3]
      %s262 = scalar_lea.vmem %s1, 2
      %v263 = vld [vmem:[%s262] sm:$0x3]
      %v272 = vunpack.c.l.b16 %v253
      %v273 = vunpack.c.l.b16 %v254
      %v274 = vunpack.c.l.b16 %v255
      %v275 = vunpack.c.l.b16 %v256
      %v276 = vunpack.c.l.b16 %v257
      %v277 = vunpack.c.l.b16 %v258
      %v278 = vunpack.c.l.b16 %v259
      %v279 = vunpack.c.l.b16 %v260
      %v280 = vpack.c.b16 %v273, %v272
      %v281 = vpack.c.b16 %v275, %v274
      %v282 = vpack.c.b16 %v277, %v276
      %v283 = vpack.c.b16 %v279, %v278
      %284 = vrot.lane.b32.xlu0 %v280, 124
      %v285 = vpop.permute.xlu0 %284
      %286 = vrot.lane.b32.xlu0 %v281, 124
      %v287 = vpop.permute.xlu0 %286
      %288 = vrot.lane.b32.xlu0 %v282, 124
      %v289 = vpop.permute.xlu0 %288
      %290 = vrot.lane.b32.xlu0 %v283, 124
      %v291 = vpop.permute.xlu0 %290
      %vm292 = vcmask 31744
      %v294 = vsel %vm292, %v285, 0
      %v297 = vsel %vm292, %v287, 0
      %v300 = vsel %vm292, %v289, 0
      %v303 = vsel %vm292, %v291, 0
      %vm305 = vcmask 1041408
      %v307 = vsel %vm305, %v263, 0
      %309 = vmatprep.subr.bf16.mxu0 0
      %310 = vmatpush1.bf16.msra.mxu0 0
      %311 = vmatprep.subr.bf16.mxu0 0
      %312 = vmatpush1.bf16.msra.mxu0 0
      %313 = vmatprep.subr.bf16.mxu0 0
      %314 = vmatpush1.bf16.msra.mxu0 0
      %315 = vmatprep.subr.bf16.mxu0 0
      %316 = vmatpush1.bf16.msra.mxu0 0
      %317 = vmatprep.subr.bf16.mxu0 0
      %318 = vmatpush1.bf16.msra.mxu0 0
      %319 = vmatprep.subr.bf16.mxu0 0
      %320 = vmatpush1.bf16.msra.mxu0 0
      %321 = vmatprep.subr.bf16.mxu0 0
      %322 = vmatpush1.bf16.msra.mxu0 0
      %323 = vmatprep.subr.bf16.mxu0 0
      %324 = vmatpush1.bf16.msra.mxu0 %v307
      %325 = vmatprep.subr.bf16.mxu0 0
      %326 = vmatpush2.bf16.msra.mxu0 0
      %327 = vmatprep.subr.bf16.mxu0 0
      %328 = vmatpush2.bf16.msra.mxu0 0
      %329 = vmatprep.subr.bf16.mxu0 0
      %330 = vmatpush2.bf16.msra.mxu0 0
      %331 = vmatprep.subr.bf16.mxu0 0
      %332 = vmatpush2.bf16.msra.mxu0 0
      %333 = vmatprep.subr.bf16.mxu0 0
      %334 = vmatpush2.bf16.msra.mxu0 0
      %335 = vmatprep.subr.bf16.mxu0 0
      %336 = vmatpush2.bf16.msra.mxu0 0
      %337 = vmatprep.subr.bf16.mxu0 0
      %338 = vmatpush2.bf16.msra.mxu0 0
      %339 = vmatprep.subr.bf16.mxu0 0
      %340 = vmatpush2.bf16.msra.mxu0 0
      %341 = vmatprep.mubr.bf16.mxu0 0
      %342 = vmatmul.mubr.bf16.gmra.mxu0 %v294
      %v343 = vpop.f32.mrf.mxu0
      %v344 = vadd.f32 0.0, %v343
      %v345 = vpop.f32.mrf.mxu0
      %v346 = vpop.f32.mrf.mxu0
      %v347 = vadd.f32 0.0, %v346
      %v348 = vpop.f32.mrf.mxu0
      %349 = vmatprep.mubr.bf16.mxu0 0
      %350 = vmatmul.mubr.bf16.gmra.mxu0 %v297
      %v351 = vpop.f32.mrf.mxu0
      %v352 = vadd.f32 0.0, %v351
      %v353 = vpop.f32.mrf.mxu0
      %v354 = vpop.f32.mrf.mxu0
      %v355 = vadd.f32 0.0, %v354
      %v356 = vpop.f32.mrf.mxu0
      %357 = vmatprep.mubr.bf16.mxu0 0
      %358 = vmatmul.mubr.bf16.gmra.mxu0 %v300
      %v359 = vpop.f32.mrf.mxu0
      %v360 = vadd.f32 0.0, %v359
      %v361 = vpop.f32.mrf.mxu0
      %v362 = vpop.f32.mrf.mxu0
      %v363 = vadd.f32 0.0, %v362
      %v364 = vpop.f32.mrf.mxu0
      %365 = vmatprep.mubr.bf16.mxu0 0
      %366 = vmatmul.mubr.bf16.gmra.mxu0 %v303
      %v367 = vpop.f32.mrf.mxu0
      %v368 = vadd.f32 0.0, %v367
      %v369 = vpop.f32.mrf.mxu0
      %v370 = vpop.f32.mrf.mxu0
      %v371 = vadd.f32 0.0, %v370
      %v372 = vpop.f32.mrf.mxu0
      %373 = vdwg.mxu0
      %v375 = vsel %vm292, %v280, 0
      %v378 = vsel %vm292, %v281, 0
      %v381 = vsel %vm292, %v282, 0
      %v384 = vsel %vm292, %v283, 0
      %v387 = vsel %vm305, %v261, 0
      %389 = vmatprep.subr.bf16.mxu0 0
      %390 = vmatpush1.bf16.msra.mxu0 0
      %391 = vmatprep.subr.bf16.mxu0 0
      %392 = vmatpush1.bf16.msra.mxu0 0
      %393 = vmatprep.subr.bf16.mxu0 0
      %394 = vmatpush1.bf16.msra.mxu0 0
      %395 = vmatprep.subr.bf16.mxu0 0
      %396 = vmatpush1.bf16.msra.mxu0 0
      %397 = vmatprep.subr.bf16.mxu0 0
      %398 = vmatpush1.bf16.msra.mxu0 0
      %399 = vmatprep.subr.bf16.mxu0 0
      %400 = vmatpush1.bf16.msra.mxu0 0
      %401 = vmatprep.subr.bf16.mxu0 0
      %402 = vmatpush1.bf16.msra.mxu0 0
      %403 = vmatprep.subr.bf16.mxu0 0
      %404 = vmatpush1.bf16.msra.mxu0 %v387
      %405 = vmatprep.subr.bf16.mxu0 0
      %406 = vmatpush2.bf16.msra.mxu0 0
      %407 = vmatprep.subr.bf16.mxu0 0
      %408 = vmatpush2.bf16.msra.mxu0 0
      %409 = vmatprep.subr.bf16.mxu0 0
      %410 = vmatpush2.bf16.msra.mxu0 0
      %411 = vmatprep.subr.bf16.mxu0 0
      %412 = vmatpush2.bf16.msra.mxu0 0
      %413 = vmatprep.subr.bf16.mxu0 0
      %414 = vmatpush2.bf16.msra.mxu0 0
      %415 = vmatprep.subr.bf16.mxu0 0
      %416 = vmatpush2.bf16.msra.mxu0 0
      %417 = vmatprep.subr.bf16.mxu0 0
      %418 = vmatpush2.bf16.msra.mxu0 0
      %419 = vmatprep.subr.bf16.mxu0 0
      %420 = vmatpush2.bf16.msra.mxu0 0
      %421 = vmatprep.mubr.bf16.mxu0 0
      %422 = vmatmul.mubr.bf16.gmra.mxu0 %v375
      %v423 = vpop.f32.mrf.mxu0
      %v424 = vadd.f32 %v344, %v423
      %v425 = vpop.f32.mrf.mxu0
      %v426 = vpop.f32.mrf.mxu0
      %v427 = vadd.f32 %v347, %v426
      %v428 = vpop.f32.mrf.mxu0
      %429 = vmatprep.mubr.bf16.mxu0 0
      %430 = vmatmul.mubr.bf16.gmra.mxu0 %v378
      %v431 = vpop.f32.mrf.mxu0
      %v432 = vadd.f32 %v352, %v431
      %v433 = vpop.f32.mrf.mxu0
      %v434 = vpop.f32.mrf.mxu0
      %v435 = vadd.f32 %v355, %v434
      %v436 = vpop.f32.mrf.mxu0
      %437 = vmatprep.mubr.bf16.mxu0 0
      %438 = vmatmul.mubr.bf16.gmra.mxu0 %v381
      %v439 = vpop.f32.mrf.mxu0
      %v440 = vadd.f32 %v360, %v439
      %v441 = vpop.f32.mrf.mxu0
      %v442 = vpop.f32.mrf.mxu0
      %v443 = vadd.f32 %v363, %v442
      %v444 = vpop.f32.mrf.mxu0
      %445 = vmatprep.mubr.bf16.mxu0 0
      %446 = vmatmul.mubr.bf16.gmra.mxu0 %v384
      %v447 = vpop.f32.mrf.mxu0
      %v448 = vadd.f32 %v368, %v447
      %v449 = vpop.f32.mrf.mxu0
      %v450 = vpop.f32.mrf.mxu0
      %v451 = vadd.f32 %v371, %v450
      %v452 = vpop.f32.mrf.mxu0
      %453 = vdwg.mxu0
      %v454 = vld [vmem:[%s246] sm:$0xf]
      %v455 = vld [vmem:[%s246 + $0x4] sm:$0x1]
      %v456 = vld [vmem:[%s246 + $0x8] sm:$0xf]
      %v457 = vld [vmem:[%s246 + $0xc] sm:$0x1]
      %v458 = vld [vmem:[%s246 + $0x10] sm:$0xf]
      %v459 = vld [vmem:[%s246 + $0x14] sm:$0x1]
      %v460 = vld [vmem:[%s246 + $0x18] sm:$0xf]
      %v461 = vld [vmem:[%s246 + $0x1c] sm:$0x1]
      %v462 = vld [vmem:[%s246 + $0x20] sm:$0xf]
      %v463 = vld [vmem:[%s246 + $0x24] sm:$0x1]
      %v464 = vld [vmem:[%s246 + $0x28] sm:$0xf]
      %v465 = vld [vmem:[%s246 + $0x2c] sm:$0x1]
      %v466 = vld [vmem:[%s246 + $0x30] sm:$0xf]
      %v467 = vld [vmem:[%s246 + $0x34] sm:$0x1]
      %v468 = vld [vmem:[%s246 + $0x38] sm:$0xf]
      %v469 = vld [vmem:[%s246 + $0x3c] sm:$0x1]
      %vm470 = vsmask.f32 3328
      %vm471 = vsmask.f32 7440
      %vm472 = vmor %vm470, %vm471
      %v474 = vshrl.u32 %v454, 16
      %v476 = vrot.slane %v474, 4
      %v477 = vshll.u32 %v454, 16
      %v479 = vrot.slane %v477, 5
      %v480 = vor.u32 %v476, %v479
      %v481 = vrot.slane %v480, 4
      %v483 = vshll.u32 %v455, 16
      %v485 = vrot.slane %v483, 5
      %v486 = vsel %vm472, %v481, %v485
      %v488 = vshrl.u32 %v456, 16
      %v490 = vrot.slane %v488, 4
      %v491 = vshll.u32 %v456, 16
      %v493 = vrot.slane %v491, 5
      %v494 = vor.u32 %v490, %v493
      %v495 = vrot.slane %v494, 4
      %v497 = vshll.u32 %v457, 16
      %v499 = vrot.slane %v497, 5
      %v500 = vsel %vm472, %v495, %v499
      %v502 = vshrl.u32 %v458, 16
      %v504 = vrot.slane %v502, 4
      %v505 = vshll.u32 %v458, 16
      %v507 = vrot.slane %v505, 5
      %v508 = vor.u32 %v504, %v507
      %v509 = vrot.slane %v508, 4
      %v511 = vshll.u32 %v459, 16
      %v513 = vrot.slane %v511, 5
      %v514 = vsel %vm472, %v509, %v513
      %v516 = vshrl.u32 %v460, 16
      %v518 = vrot.slane %v516, 4
      %v519 = vshll.u32 %v460, 16
      %v521 = vrot.slane %v519, 5
      %v522 = vor.u32 %v518, %v521
      %v523 = vrot.slane %v522, 4
      %v525 = vshll.u32 %v461, 16
      %v527 = vrot.slane %v525, 5
      %v528 = vsel %vm472, %v523, %v527
      %v530 = vshrl.u32 %v462, 16
      %v532 = vrot.slane %v530, 4
      %v533 = vshll.u32 %v462, 16
      %v535 = vrot.slane %v533, 5
      %v536 = vor.u32 %v532, %v535
      %v537 = vrot.slane %v536, 4
      %v539 = vshll.u32 %v463, 16
      %v541 = vrot.slane %v539, 5
      %v542 = vsel %vm472, %v537, %v541
      %v544 = vshrl.u32 %v464, 16
      %v546 = vrot.slane %v544, 4
      %v547 = vshll.u32 %v464, 16
      %v549 = vrot.slane %v547, 5
      %v550 = vor.u32 %v546, %v549
      %v551 = vrot.slane %v550, 4
      %v553 = vshll.u32 %v465, 16
      %v555 = vrot.slane %v553, 5
      %v556 = vsel %vm472, %v551, %v555
      %v558 = vshrl.u32 %v466, 16
      %v560 = vrot.slane %v558, 4
      %v561 = vshll.u32 %v466, 16
      %v563 = vrot.slane %v561, 5
      %v564 = vor.u32 %v560, %v563
      %v565 = vrot.slane %v564, 4
      %v567 = vshll.u32 %v467, 16
      %v569 = vrot.slane %v567, 5
      %v570 = vsel %vm472, %v565, %v569
      %v572 = vshrl.u32 %v468, 16
      %v574 = vrot.slane %v572, 4
      %v575 = vshll.u32 %v468, 16
      %v577 = vrot.slane %v575, 5
      %v578 = vor.u32 %v574, %v577
      %v579 = vrot.slane %v578, 4
      %v581 = vshll.u32 %v469, 16
      %v583 = vrot.slane %v581, 5
      %v584 = vsel %vm472, %v579, %v583
      %s585 = scalar_lea.vmem %s1, 4
      %v586 = vld [vmem:[%s585] sm:$0x3]
      %v587 = vunpack.c.l.b16 %v486
      %v588 = vunpack.c.l.b16 %v500
      %v589 = vunpack.c.l.b16 %v514
      %v590 = vunpack.c.l.b16 %v528
      %v591 = vunpack.c.l.b16 %v542
      %v592 = vunpack.c.l.b16 %v556
      %v593 = vunpack.c.l.b16 %v570
      %v594 = vunpack.c.l.b16 %v584
      %v595 = vpack.c.b16 %v588, %v587
      %v596 = vpack.c.b16 %v590, %v589
      %v597 = vpack.c.b16 %v592, %v591
      %v598 = vpack.c.b16 %v594, %v593
      %v600 = vsel %vm292, %v595, 0
      %v603 = vsel %vm292, %v596, 0
      %v606 = vsel %vm292, %v597, 0
      %v609 = vsel %vm292, %v598, 0
      %v612 = vsel %vm305, %v586, 0
      %614 = vmatprep.subr.bf16.mxu0 0
      %615 = vmatpush1.bf16.msra.mxu0 0
      %616 = vmatprep.subr.bf16.mxu0 0
      %617 = vmatpush1.bf16.msra.mxu0 0
      %618 = vmatprep.subr.bf16.mxu0 0
      %619 = vmatpush1.bf16.msra.mxu0 0
      %620 = vmatprep.subr.bf16.mxu0 0
      %621 = vmatpush1.bf16.msra.mxu0 0
      %622 = vmatprep.subr.bf16.mxu0 0
      %623 = vmatpush1.bf16.msra.mxu0 0
      %624 = vmatprep.subr.bf16.mxu0 0
      %625 = vmatpush1.bf16.msra.mxu0 0
      %626 = vmatprep.subr.bf16.mxu0 0
      %627 = vmatpush1.bf16.msra.mxu0 0
      %628 = vmatprep.subr.bf16.mxu0 0
      %629 = vmatpush1.bf16.msra.mxu0 %v612
      %630 = vmatprep.subr.bf16.mxu0 0
      %631 = vmatpush2.bf16.msra.mxu0 0
      %632 = vmatprep.subr.bf16.mxu0 0
      %633 = vmatpush2.bf16.msra.mxu0 0
      %634 = vmatprep.subr.bf16.mxu0 0
      %635 = vmatpush2.bf16.msra.mxu0 0
      %636 = vmatprep.subr.bf16.mxu0 0
      %637 = vmatpush2.bf16.msra.mxu0 0
      %638 = vmatprep.subr.bf16.mxu0 0
      %639 = vmatpush2.bf16.msra.mxu0 0
      %640 = vmatprep.subr.bf16.mxu0 0
      %641 = vmatpush2.bf16.msra.mxu0 0
      %642 = vmatprep.subr.bf16.mxu0 0
      %643 = vmatpush2.bf16.msra.mxu0 0
      %644 = vmatprep.subr.bf16.mxu0 0
      %645 = vmatpush2.bf16.msra.mxu0 0
      %646 = vmatprep.mubr.bf16.mxu0 0
      %647 = vmatmul.mubr.bf16.gmra.mxu0 %v600
      %v648 = vpop.f32.mrf.mxu0
      %v649 = vadd.f32 0.0, %v648
      %v650 = vpop.f32.mrf.mxu0
      %v651 = vpop.f32.mrf.mxu0
      %v652 = vadd.f32 0.0, %v651
      %v653 = vpop.f32.mrf.mxu0
      %654 = vmatprep.mubr.bf16.mxu0 0
      %655 = vmatmul.mubr.bf16.gmra.mxu0 %v603
      %v656 = vpop.f32.mrf.mxu0
      %v657 = vadd.f32 0.0, %v656
      %v658 = vpop.f32.mrf.mxu0
      %v659 = vpop.f32.mrf.mxu0
      %v660 = vadd.f32 0.0, %v659
      %v661 = vpop.f32.mrf.mxu0
      %662 = vmatprep.mubr.bf16.mxu0 0
      %663 = vmatmul.mubr.bf16.gmra.mxu0 %v606
      %v664 = vpop.f32.mrf.mxu0
      %v665 = vadd.f32 0.0, %v664
      %v666 = vpop.f32.mrf.mxu0
      %v667 = vpop.f32.mrf.mxu0
      %v668 = vadd.f32 0.0, %v667
      %v669 = vpop.f32.mrf.mxu0
      %670 = vmatprep.mubr.bf16.mxu0 0
      %671 = vmatmul.mubr.bf16.gmra.mxu0 %v609
      %v672 = vpop.f32.mrf.mxu0
      %v673 = vadd.f32 0.0, %v672
      %v674 = vpop.f32.mrf.mxu0
      %v675 = vpop.f32.mrf.mxu0
      %v676 = vadd.f32 0.0, %v675
      %v677 = vpop.f32.mrf.mxu0
      %678 = vdwg.mxu0
      %v679 = vadd.f32 %v424, %v649
      %v680 = vadd.f32 %v427, %v652
      %v681 = vadd.f32 %v432, %v657
      %v682 = vadd.f32 %v435, %v660
      %v683 = vadd.f32 %v440, %v665
      %v684 = vadd.f32 %v443, %v668
      %v685 = vadd.f32 %v448, %v673
      %v686 = vadd.f32 %v451, %v676
      %s687 = scalar_lea.vmem %s1, 6
      %v688 = vld [vmem:[%s687] sm:$0x3]
      %689 = vrot.lane.b32.xlu0 %v280, 120
      %v690 = vpop.permute.xlu0 %689
      %691 = vrot.lane.b32.xlu0 %v281, 120
      %v692 = vpop.permute.xlu0 %691
      %693 = vrot.lane.b32.xlu0 %v282, 120
      %v694 = vpop.permute.xlu0 %693
      %695 = vrot.lane.b32.xlu0 %v283, 120
      %v696 = vpop.permute.xlu0 %695
      %v698 = vsel %vm292, %v690, 0
      %v701 = vsel %vm292, %v692, 0
      %v704 = vsel %vm292, %v694, 0
      %v707 = vsel %vm292, %v696, 0
      %v710 = vsel %vm305, %v688, 0
      %712 = vmatprep.subr.bf16.mxu0 0
      %713 = vmatpush1.bf16.msra.mxu0 0
      %714 = vmatprep.subr.bf16.mxu0 0
      %715 = vmatpush1.bf16.msra.mxu0 0
      %716 = vmatprep.subr.bf16.mxu0 0
      %717 = vmatpush1.bf16.msra.mxu0 0
      %718 = vmatprep.subr.bf16.mxu0 0
      %719 = vmatpush1.bf16.msra.mxu0 0
      %720 = vmatprep.subr.bf16.mxu0 0
      %721 = vmatpush1.bf16.msra.mxu0 0
      %722 = vmatprep.subr.bf16.mxu0 0
      %723 = vmatpush1.bf16.msra.mxu0 0
      %724 = vmatprep.subr.bf16.mxu0 0
      %725 = vmatpush1.bf16.msra.mxu0 0
      %726 = vmatprep.subr.bf16.mxu0 0
      %727 = vmatpush1.bf16.msra.mxu0 %v710
      %728 = vmatprep.subr.bf16.mxu0 0
      %729 = vmatpush2.bf16.msra.mxu0 0
      %730 = vmatprep.subr.bf16.mxu0 0
      %731 = vmatpush2.bf16.msra.mxu0 0
      %732 = vmatprep.subr.bf16.mxu0 0
      %733 = vmatpush2.bf16.msra.mxu0 0
      %734 = vmatprep.subr.bf16.mxu0 0
      %735 = vmatpush2.bf16.msra.mxu0 0
      %736 = vmatprep.subr.bf16.mxu0 0
      %737 = vmatpush2.bf16.msra.mxu0 0
      %738 = vmatprep.subr.bf16.mxu0 0
      %739 = vmatpush2.bf16.msra.mxu0 0
      %740 = vmatprep.subr.bf16.mxu0 0
      %741 = vmatpush2.bf16.msra.mxu0 0
      %742 = vmatprep.subr.bf16.mxu0 0
      %743 = vmatpush2.bf16.msra.mxu0 0
      %744 = vmatprep.mubr.bf16.mxu0 0
      %745 = vmatmul.mubr.bf16.gmra.mxu0 %v698
      %v746 = vpop.f32.mrf.mxu0
      %v747 = vadd.f32 0.0, %v746
      %v748 = vpop.f32.mrf.mxu0
      %v749 = vpop.f32.mrf.mxu0
      %v750 = vadd.f32 0.0, %v749
      %v751 = vpop.f32.mrf.mxu0
      %752 = vmatprep.mubr.bf16.mxu0 0
      %753 = vmatmul.mubr.bf16.gmra.mxu0 %v701
      %v754 = vpop.f32.mrf.mxu0
      %v755 = vadd.f32 0.0, %v754
      %v756 = vpop.f32.mrf.mxu0
      %v757 = vpop.f32.mrf.mxu0
      %v758 = vadd.f32 0.0, %v757
      %v759 = vpop.f32.mrf.mxu0
      %760 = vmatprep.mubr.bf16.mxu0 0
      %761 = vmatmul.mubr.bf16.gmra.mxu0 %v704
      %v762 = vpop.f32.mrf.mxu0
      %v763 = vadd.f32 0.0, %v762
      %v764 = vpop.f32.mrf.mxu0
      %v765 = vpop.f32.mrf.mxu0
      %v766 = vadd.f32 0.0, %v765
      %v767 = vpop.f32.mrf.mxu0
      %768 = vmatprep.mubr.bf16.mxu0 0
      %769 = vmatmul.mubr.bf16.gmra.mxu0 %v707
      %v770 = vpop.f32.mrf.mxu0
      %v771 = vadd.f32 0.0, %v770
      %v772 = vpop.f32.mrf.mxu0
      %v773 = vpop.f32.mrf.mxu0
      %v774 = vadd.f32 0.0, %v773
      %v775 = vpop.f32.mrf.mxu0
      %776 = vdwg.mxu0
      %v777 = vadd.f32 %v679, %v747
      %v778 = vadd.f32 %v680, %v750
      %v779 = vadd.f32 %v681, %v755
      %v780 = vadd.f32 %v682, %v758
      %v781 = vadd.f32 %v683, %v763
      %v782 = vadd.f32 %v684, %v766
      %v783 = vadd.f32 %v685, %v771
      %v784 = vadd.f32 %v686, %v774
      %s785 = scalar_lea.vmem %s1, 8
      %v786 = vld [vmem:[%s785] sm:$0x3]
      %787 = vrot.lane.b32.xlu0 %v280, 116
      %v788 = vpop.permute.xlu0 %787
      %789 = vrot.lane.b32.xlu0 %v281, 116
      %v790 = vpop.permute.xlu0 %789
      %791 = vrot.lane.b32.xlu0 %v282, 116
      %v792 = vpop.permute.xlu0 %791
      %793 = vrot.lane.b32.xlu0 %v283, 116
      %v794 = vpop.permute.xlu0 %793
      %v796 = vsel %vm292, %v788, 0
      %v799 = vsel %vm292, %v790, 0
      %v802 = vsel %vm292, %v792, 0
      %v805 = vsel %vm292, %v794, 0
      %v808 = vsel %vm305, %v786, 0
      %810 = vmatprep.subr.bf16.mxu0 0
      %811 = vmatpush1.bf16.msra.mxu0 0
      %812 = vmatprep.subr.bf16.mxu0 0
      %813 = vmatpush1.bf16.msra.mxu0 0
      %814 = vmatprep.subr.bf16.mxu0 0
      %815 = vmatpush1.bf16.msra.mxu0 0
      %816 = vmatprep.subr.bf16.mxu0 0
      %817 = vmatpush1.bf16.msra.mxu0 0
      %818 = vmatprep.subr.bf16.mxu0 0
      %819 = vmatpush1.bf16.msra.mxu0 0
      %820 = vmatprep.subr.bf16.mxu0 0
      %821 = vmatpush1.bf16.msra.mxu0 0
      %822 = vmatprep.subr.bf16.mxu0 0
      %823 = vmatpush1.bf16.msra.mxu0 0
      %824 = vmatprep.subr.bf16.mxu0 0
      %825 = vmatpush1.bf16.msra.mxu0 %v808
      %826 = vmatprep.subr.bf16.mxu0 0
      %827 = vmatpush2.bf16.msra.mxu0 0
      %828 = vmatprep.subr.bf16.mxu0 0
      %829 = vmatpush2.bf16.msra.mxu0 0
      %830 = vmatprep.subr.bf16.mxu0 0
      %831 = vmatpush2.bf16.msra.mxu0 0
      %832 = vmatprep.subr.bf16.mxu0 0
      %833 = vmatpush2.bf16.msra.mxu0 0
      %834 = vmatprep.subr.bf16.mxu0 0
      %835 = vmatpush2.bf16.msra.mxu0 0
      %836 = vmatprep.subr.bf16.mxu0 0
      %837 = vmatpush2.bf16.msra.mxu0 0
      %838 = vmatprep.subr.bf16.mxu0 0
      %839 = vmatpush2.bf16.msra.mxu0 0
      %840 = vmatprep.subr.bf16.mxu0 0
      %841 = vmatpush2.bf16.msra.mxu0 0
      %842 = vmatprep.mubr.bf16.mxu0 0
      %843 = vmatmul.mubr.bf16.gmra.mxu0 %v796
      %v844 = vpop.f32.mrf.mxu0
      %v845 = vadd.f32 0.0, %v844
      %v846 = vpop.f32.mrf.mxu0
      %v847 = vpop.f32.mrf.mxu0
      %v848 = vadd.f32 0.0, %v847
      %v849 = vpop.f32.mrf.mxu0
      %850 = vmatprep.mubr.bf16.mxu0 0
      %851 = vmatmul.mubr.bf16.gmra.mxu0 %v799
      %v852 = vpop.f32.mrf.mxu0
      %v853 = vadd.f32 0.0, %v852
      %v854 = vpop.f32.mrf.mxu0
      %v855 = vpop.f32.mrf.mxu0
      %v856 = vadd.f32 0.0, %v855
      %v857 = vpop.f32.mrf.mxu0
      %858 = vmatprep.mubr.bf16.mxu0 0
      %859 = vmatmul.mubr.bf16.gmra.mxu0 %v802
      %v860 = vpop.f32.mrf.mxu0
      %v861 = vadd.f32 0.0, %v860
      %v862 = vpop.f32.mrf.mxu0
      %v863 = vpop.f32.mrf.mxu0
      %v864 = vadd.f32 0.0, %v863
      %v865 = vpop.f32.mrf.mxu0
      %866 = vmatprep.mubr.bf16.mxu0 0
      %867 = vmatmul.mubr.bf16.gmra.mxu0 %v805
      %v868 = vpop.f32.mrf.mxu0
      %v869 = vadd.f32 0.0, %v868
      %v870 = vpop.f32.mrf.mxu0
      %v871 = vpop.f32.mrf.mxu0
      %v872 = vadd.f32 0.0, %v871
      %v873 = vpop.f32.mrf.mxu0
      %874 = vdwg.mxu0
      %v875 = vadd.f32 %v777, %v845
      %v876 = vadd.f32 %v778, %v848
      %v877 = vadd.f32 %v779, %v853
      %v878 = vadd.f32 %v780, %v856
      %v879 = vadd.f32 %v781, %v861
      %v880 = vadd.f32 %v782, %v864
      %v881 = vadd.f32 %v783, %v869
      %v882 = vadd.f32 %v784, %v872
      %s883 = scalar_lea.vmem %s1, 10
      %v884 = vld [vmem:[%s883] sm:$0x3]
      %885 = vrot.lane.b32.xlu0 %v595, 120
      %v886 = vpop.permute.xlu0 %885
      %887 = vrot.lane.b32.xlu0 %v596, 120
      %v888 = vpop.permute.xlu0 %887
      %889 = vrot.lane.b32.xlu0 %v597, 120
      %v890 = vpop.permute.xlu0 %889
      %891 = vrot.lane.b32.xlu0 %v598, 120
      %v892 = vpop.permute.xlu0 %891
      %v894 = vsel %vm292, %v886, 0
      %v897 = vsel %vm292, %v888, 0
      %v900 = vsel %vm292, %v890, 0
      %v903 = vsel %vm292, %v892, 0
      %v906 = vsel %vm305, %v884, 0
      %908 = vmatprep.subr.bf16.mxu0 0
      %909 = vmatpush1.bf16.msra.mxu0 0
      %910 = vmatprep.subr.bf16.mxu0 0
      %911 = vmatpush1.bf16.msra.mxu0 0
      %912 = vmatprep.subr.bf16.mxu0 0
      %913 = vmatpush1.bf16.msra.mxu0 0
      %914 = vmatprep.subr.bf16.mxu0 0
      %915 = vmatpush1.bf16.msra.mxu0 0
      %916 = vmatprep.subr.bf16.mxu0 0
      %917 = vmatpush1.bf16.msra.mxu0 0
      %918 = vmatprep.subr.bf16.mxu0 0
      %919 = vmatpush1.bf16.msra.mxu0 0
      %920 = vmatprep.subr.bf16.mxu0 0
      %921 = vmatpush1.bf16.msra.mxu0 0
      %922 = vmatprep.subr.bf16.mxu0 0
      %923 = vmatpush1.bf16.msra.mxu0 %v906
      %924 = vmatprep.subr.bf16.mxu0 0
      %925 = vmatpush2.bf16.msra.mxu0 0
      %926 = vmatprep.subr.bf16.mxu0 0
      %927 = vmatpush2.bf16.msra.mxu0 0
      %928 = vmatprep.subr.bf16.mxu0 0
      %929 = vmatpush2.bf16.msra.mxu0 0
      %930 = vmatprep.subr.bf16.mxu0 0
      %931 = vmatpush2.bf16.msra.mxu0 0
      %932 = vmatprep.subr.bf16.mxu0 0
      %933 = vmatpush2.bf16.msra.mxu0 0
      %934 = vmatprep.subr.bf16.mxu0 0
      %935 = vmatpush2.bf16.msra.mxu0 0
      %936 = vmatprep.subr.bf16.mxu0 0
      %937 = vmatpush2.bf16.msra.mxu0 0
      %938 = vmatprep.subr.bf16.mxu0 0
      %939 = vmatpush2.bf16.msra.mxu0 0
      %940 = vmatprep.mubr.bf16.mxu0 0
      %941 = vmatmul.mubr.bf16.gmra.mxu0 %v894
      %v942 = vpop.f32.mrf.mxu0
      %v943 = vadd.f32 0.0, %v942
      %v944 = vpop.f32.mrf.mxu0
      %v945 = vpop.f32.mrf.mxu0
      %v946 = vadd.f32 0.0, %v945
      %v947 = vpop.f32.mrf.mxu0
      %948 = vmatprep.mubr.bf16.mxu0 0
      %949 = vmatmul.mubr.bf16.gmra.mxu0 %v897
      %v950 = vpop.f32.mrf.mxu0
      %v951 = vadd.f32 0.0, %v950
      %v952 = vpop.f32.mrf.mxu0
      %v953 = vpop.f32.mrf.mxu0
      %v954 = vadd.f32 0.0, %v953
      %v955 = vpop.f32.mrf.mxu0
      %956 = vmatprep.mubr.bf16.mxu0 0
      %957 = vmatmul.mubr.bf16.gmra.mxu0 %v900
      %v958 = vpop.f32.mrf.mxu0
      %v959 = vadd.f32 0.0, %v958
      %v960 = vpop.f32.mrf.mxu0
      %v961 = vpop.f32.mrf.mxu0
      %v962 = vadd.f32 0.0, %v961
      %v963 = vpop.f32.mrf.mxu0
      %964 = vmatprep.mubr.bf16.mxu0 0
      %965 = vmatmul.mubr.bf16.gmra.mxu0 %v903
      %v966 = vpop.f32.mrf.mxu0
      %v967 = vadd.f32 0.0, %v966
      %v968 = vpop.f32.mrf.mxu0
      %v969 = vpop.f32.mrf.mxu0
      %v970 = vadd.f32 0.0, %v969
      %v971 = vpop.f32.mrf.mxu0
      %972 = vdwg.mxu0
      %v973 = vadd.f32 %v875, %v943
      %v974 = vadd.f32 %v876, %v946
      %v975 = vadd.f32 %v877, %v951
      %v976 = vadd.f32 %v878, %v954
      %v977 = vadd.f32 %v879, %v959
      %v978 = vadd.f32 %v880, %v962
      %v979 = vadd.f32 %v881, %v967
      %v980 = vadd.f32 %v882, %v970
      %s981 = scalar_lea.vmem %s246, 8
      %v982 = vld [vmem:[%s981] sm:$0xf]
      %v983 = vld [vmem:[%s981 + $0x8] sm:$0xf]
      %v984 = vld [vmem:[%s981 + $0x10] sm:$0xf]
      %v985 = vld [vmem:[%s981 + $0x18] sm:$0xf]
      %v986 = vld [vmem:[%s981 + $0x20] sm:$0xf]
      %v987 = vld [vmem:[%s981 + $0x28] sm:$0xf]
      %v988 = vld [vmem:[%s981 + $0x30] sm:$0xf]
      %v989 = vld [vmem:[%s981 + $0x38] sm:$0xf]
      %s990 = scalar_lea.vmem %s1, 12
      %v991 = vld [vmem:[%s990] sm:$0x3]
      %v1000 = vunpack.c.l.b16 %v982
      %v1001 = vunpack.c.l.b16 %v983
      %v1002 = vunpack.c.l.b16 %v984
      %v1003 = vunpack.c.l.b16 %v985
      %v1004 = vunpack.c.l.b16 %v986
      %v1005 = vunpack.c.l.b16 %v987
      %v1006 = vunpack.c.l.b16 %v988
      %v1007 = vunpack.c.l.b16 %v989
      %v1008 = vpack.c.b16 %v1001, %v1000
      %v1009 = vpack.c.b16 %v1003, %v1002
      %v1010 = vpack.c.b16 %v1005, %v1004
      %v1011 = vpack.c.b16 %v1007, %v1006
      %v1013 = vsel %vm292, %v1008, 0
      %v1016 = vsel %vm292, %v1009, 0
      %v1019 = vsel %vm292, %v1010, 0
      %v1022 = vsel %vm292, %v1011, 0
      %v1025 = vsel %vm305, %v991, 0
      %1027 = vmatprep.subr.bf16.mxu0 0
      %1028 = vmatpush1.bf16.msra.mxu0 0
      %1029 = vmatprep.subr.bf16.mxu0 0
      %1030 = vmatpush1.bf16.msra.mxu0 0
      %1031 = vmatprep.subr.bf16.mxu0 0
      %1032 = vmatpush1.bf16.msra.mxu0 0
      %1033 = vmatprep.subr.bf16.mxu0 0
      %1034 = vmatpush1.bf16.msra.mxu0 0
      %1035 = vmatprep.subr.bf16.mxu0 0
      %1036 = vmatpush1.bf16.msra.mxu0 0
      %1037 = vmatprep.subr.bf16.mxu0 0
      %1038 = vmatpush1.bf16.msra.mxu0 0
      %1039 = vmatprep.subr.bf16.mxu0 0
      %1040 = vmatpush1.bf16.msra.mxu0 0
      %1041 = vmatprep.subr.bf16.mxu0 0
      %1042 = vmatpush1.bf16.msra.mxu0 %v1025
      %1043 = vmatprep.subr.bf16.mxu0 0
      %1044 = vmatpush2.bf16.msra.mxu0 0
      %1045 = vmatprep.subr.bf16.mxu0 0
      %1046 = vmatpush2.bf16.msra.mxu0 0
      %1047 = vmatprep.subr.bf16.mxu0 0
      %1048 = vmatpush2.bf16.msra.mxu0 0
      %1049 = vmatprep.subr.bf16.mxu0 0
      %1050 = vmatpush2.bf16.msra.mxu0 0
      %1051 = vmatprep.subr.bf16.mxu0 0
      %1052 = vmatpush2.bf16.msra.mxu0 0
      %1053 = vmatprep.subr.bf16.mxu0 0
      %1054 = vmatpush2.bf16.msra.mxu0 0
      %1055 = vmatprep.subr.bf16.mxu0 0
      %1056 = vmatpush2.bf16.msra.mxu0 0
      %1057 = vmatprep.subr.bf16.mxu0 0
      %1058 = vmatpush2.bf16.msra.mxu0 0
      %1059 = vmatprep.mubr.bf16.mxu0 0
      %1060 = vmatmul.mubr.bf16.gmra.mxu0 %v1013
      %v1061 = vpop.f32.mrf.mxu0
      %v1062 = vadd.f32 0.0, %v1061
      %v1063 = vpop.f32.mrf.mxu0
      %v1064 = vpop.f32.mrf.mxu0
      %v1065 = vadd.f32 0.0, %v1064
      %v1066 = vpop.f32.mrf.mxu0
      %1067 = vmatprep.mubr.bf16.mxu0 0
      %1068 = vmatmul.mubr.bf16.gmra.mxu0 %v1016
      %v1069 = vpop.f32.mrf.mxu0
      %v1070 = vadd.f32 0.0, %v1069
      %v1071 = vpop.f32.mrf.mxu0
      %v1072 = vpop.f32.mrf.mxu0
      %v1073 = vadd.f32 0.0, %v1072
      %v1074 = vpop.f32.mrf.mxu0
      %1075 = vmatprep.mubr.bf16.mxu0 0
      %1076 = vmatmul.mubr.bf16.gmra.mxu0 %v1019
      %v1077 = vpop.f32.mrf.mxu0
      %v1078 = vadd.f32 0.0, %v1077
      %v1079 = vpop.f32.mrf.mxu0
      %v1080 = vpop.f32.mrf.mxu0
      %v1081 = vadd.f32 0.0, %v1080
      %v1082 = vpop.f32.mrf.mxu0
      %1083 = vmatprep.mubr.bf16.mxu0 0
      %1084 = vmatmul.mubr.bf16.gmra.mxu0 %v1022
      %v1085 = vpop.f32.mrf.mxu0
      %v1086 = vadd.f32 0.0, %v1085
      %v1087 = vpop.f32.mrf.mxu0
      %v1088 = vpop.f32.mrf.mxu0
      %v1089 = vadd.f32 0.0, %v1088
      %v1090 = vpop.f32.mrf.mxu0
      %1091 = vdwg.mxu0
      %v1092 = vadd.f32 %v973, %v1062
      %v1093 = vadd.f32 %v974, %v1065
      %v1094 = vadd.f32 %v975, %v1070
      %v1095 = vadd.f32 %v976, %v1073
      %v1096 = vadd.f32 %v977, %v1078
      %v1097 = vadd.f32 %v978, %v1081
      %v1098 = vadd.f32 %v979, %v1086
      %v1099 = vadd.f32 %v980, %v1089
      %s1100 = scalar_lea.vmem %s1, 14
      %v1101 = vld [vmem:[%s1100] sm:$0x3]
      %1102 = vrot.lane.b32.xlu0 %v1008, 124
      %v1103 = vpop.permute.xlu0 %1102
      %1104 = vrot.lane.b32.xlu0 %v1009, 124
      %v1105 = vpop.permute.xlu0 %1104
      %1106 = vrot.lane.b32.xlu0 %v1010, 124
      %v1107 = vpop.permute.xlu0 %1106
      %1108 = vrot.lane.b32.xlu0 %v1011, 124
      %v1109 = vpop.permute.xlu0 %1108
      %v1111 = vsel %vm292, %v1103, 0
      %v1114 = vsel %vm292, %v1105, 0
      %v1117 = vsel %vm292, %v1107, 0
      %v1120 = vsel %vm292, %v1109, 0
      %v1123 = vsel %vm305, %v1101, 0
      %1125 = vmatprep.subr.bf16.mxu0 0
      %1126 = vmatpush1.bf16.msra.mxu0 0
      %1127 = vmatprep.subr.bf16.mxu0 0
      %1128 = vmatpush1.bf16.msra.mxu0 0
      %1129 = vmatprep.subr.bf16.mxu0 0
      %1130 = vmatpush1.bf16.msra.mxu0 0
      %1131 = vmatprep.subr.bf16.mxu0 0
      %1132 = vmatpush1.bf16.msra.mxu0 0
      %1133 = vmatprep.subr.bf16.mxu0 0
      %1134 = vmatpush1.bf16.msra.mxu0 0
      %1135 = vmatprep.subr.bf16.mxu0 0
      %1136 = vmatpush1.bf16.msra.mxu0 0
      %1137 = vmatprep.subr.bf16.mxu0 0
      %1138 = vmatpush1.bf16.msra.mxu0 0
      %1139 = vmatprep.subr.bf16.mxu0 0
      %1140 = vmatpush1.bf16.msra.mxu0 %v1123
      %1141 = vmatprep.subr.bf16.mxu0 0
      %1142 = vmatpush2.bf16.msra.mxu0 0
      %1143 = vmatprep.subr.bf16.mxu0 0
      %1144 = vmatpush2.bf16.msra.mxu0 0
      %1145 = vmatprep.subr.bf16.mxu0 0
      %1146 = vmatpush2.bf16.msra.mxu0 0
      %1147 = vmatprep.subr.bf16.mxu0 0
      %1148 = vmatpush2.bf16.msra.mxu0 0
      %1149 = vmatprep.subr.bf16.mxu0 0
      %1150 = vmatpush2.bf16.msra.mxu0 0
      %1151 = vmatprep.subr.bf16.mxu0 0
      %1152 = vmatpush2.bf16.msra.mxu0 0
      %1153 = vmatprep.subr.bf16.mxu0 0
      %1154 = vmatpush2.bf16.msra.mxu0 0
      %1155 = vmatprep.subr.bf16.mxu0 0
      %1156 = vmatpush2.bf16.msra.mxu0 0
      %1157 = vmatprep.mubr.bf16.mxu0 0
      %1158 = vmatmul.mubr.bf16.gmra.mxu0 %v1111
      %v1159 = vpop.f32.mrf.mxu0
      %v1160 = vadd.f32 0.0, %v1159
      %v1161 = vpop.f32.mrf.mxu0
      %v1162 = vpop.f32.mrf.mxu0
      %v1163 = vadd.f32 0.0, %v1162
      %v1164 = vpop.f32.mrf.mxu0
      %1165 = vmatprep.mubr.bf16.mxu0 0
      %1166 = vmatmul.mubr.bf16.gmra.mxu0 %v1114
      %v1167 = vpop.f32.mrf.mxu0
      %v1168 = vadd.f32 0.0, %v1167
      %v1169 = vpop.f32.mrf.mxu0
      %v1170 = vpop.f32.mrf.mxu0
      %v1171 = vadd.f32 0.0, %v1170
      %v1172 = vpop.f32.mrf.mxu0
      %1173 = vmatprep.mubr.bf16.mxu0 0
      %1174 = vmatmul.mubr.bf16.gmra.mxu0 %v1117
      %v1175 = vpop.f32.mrf.mxu0
      %v1176 = vadd.f32 0.0, %v1175
      %v1177 = vpop.f32.mrf.mxu0
      %v1178 = vpop.f32.mrf.mxu0
      %v1179 = vadd.f32 0.0, %v1178
      %v1180 = vpop.f32.mrf.mxu0
      %1181 = vmatprep.mubr.bf16.mxu0 0
      %1182 = vmatmul.mubr.bf16.gmra.mxu0 %v1120
      %v1183 = vpop.f32.mrf.mxu0
      %v1184 = vadd.f32 0.0, %v1183
      %v1185 = vpop.f32.mrf.mxu0
      %v1186 = vpop.f32.mrf.mxu0
      %v1187 = vadd.f32 0.0, %v1186
      %v1188 = vpop.f32.mrf.mxu0
      %1189 = vdwg.mxu0
      %v1190 = vadd.f32 %v1092, %v1160
      %v1191 = vadd.f32 %v1093, %v1163
      %v1192 = vadd.f32 %v1094, %v1168
      %v1193 = vadd.f32 %v1095, %v1171
      %v1194 = vadd.f32 %v1096, %v1176
      %v1195 = vadd.f32 %v1097, %v1179
      %v1196 = vadd.f32 %v1098, %v1184
      %v1197 = vadd.f32 %v1099, %v1187
      %v1198 = vld [vmem:[%s981] sm:$0xf]
      %v1199 = vld [vmem:[%s981 + $0x4] sm:$0x1]
      %v1200 = vld [vmem:[%s981 + $0x8] sm:$0xf]
      %v1201 = vld [vmem:[%s981 + $0xc] sm:$0x1]
      %v1202 = vld [vmem:[%s981 + $0x10] sm:$0xf]
      %v1203 = vld [vmem:[%s981 + $0x14] sm:$0x1]
      %v1204 = vld [vmem:[%s981 + $0x18] sm:$0xf]
      %v1205 = vld [vmem:[%s981 + $0x1c] sm:$0x1]
      %v1206 = vld [vmem:[%s981 + $0x20] sm:$0xf]
      %v1207 = vld [vmem:[%s981 + $0x24] sm:$0x1]
      %v1208 = vld [vmem:[%s981 + $0x28] sm:$0xf]
      %v1209 = vld [vmem:[%s981 + $0x2c] sm:$0x1]
      %v1210 = vld [vmem:[%s981 + $0x30] sm:$0xf]
      %v1211 = vld [vmem:[%s981 + $0x34] sm:$0x1]
      %v1212 = vld [vmem:[%s981 + $0x38] sm:$0xf]
      %v1213 = vld [vmem:[%s981 + $0x3c] sm:$0x1]
      %v1215 = vshrl.u32 %v1198, 16
      %v1217 = vrot.slane %v1215, 4
      %v1218 = vshll.u32 %v1198, 16
      %v1220 = vrot.slane %v1218, 5
      %v1221 = vor.u32 %v1217, %v1220
      %v1222 = vrot.slane %v1221, 4
      %v1224 = vshll.u32 %v1199, 16
      %v1226 = vrot.slane %v1224, 5
      %v1227 = vsel %vm472, %v1222, %v1226
      %v1229 = vshrl.u32 %v1200, 16
      %v1231 = vrot.slane %v1229, 4
      %v1232 = vshll.u32 %v1200, 16
      %v1234 = vrot.slane %v1232, 5
      %v1235 = vor.u32 %v1231, %v1234
      %v1236 = vrot.slane %v1235, 4
      %v1238 = vshll.u32 %v1201, 16
      %v1240 = vrot.slane %v1238, 5
      %v1241 = vsel %vm472, %v1236, %v1240
      %v1243 = vshrl.u32 %v1202, 16
      %v1245 = vrot.slane %v1243, 4
      %v1246 = vshll.u32 %v1202, 16
      %v1248 = vrot.slane %v1246, 5
      %v1249 = vor.u32 %v1245, %v1248
      %v1250 = vrot.slane %v1249, 4
      %v1252 = vshll.u32 %v1203, 16
      %v1254 = vrot.slane %v1252, 5
      %v1255 = vsel %vm472, %v1250, %v1254
      %v1257 = vshrl.u32 %v1204, 16
      %v1259 = vrot.slane %v1257, 4
      %v1260 = vshll.u32 %v1204, 16
      %v1262 = vrot.slane %v1260, 5
      %v1263 = vor.u32 %v1259, %v1262
      %v1264 = vrot.slane %v1263, 4
      %v1266 = vshll.u32 %v1205, 16
      %v1268 = vrot.slane %v1266, 5
      %v1269 = vsel %vm472, %v1264, %v1268
      %v1271 = vshrl.u32 %v1206, 16
      %v1273 = vrot.slane %v1271, 4
      %v1274 = vshll.u32 %v1206, 16
      %v1276 = vrot.slane %v1274, 5
      %v1277 = vor.u32 %v1273, %v1276
      %v1278 = vrot.slane %v1277, 4
      %v1280 = vshll.u32 %v1207, 16
      %v1282 = vrot.slane %v1280, 5
      %v1283 = vsel %vm472, %v1278, %v1282
      %v1285 = vshrl.u32 %v1208, 16
      %v1287 = vrot.slane %v1285, 4
      %v1288 = vshll.u32 %v1208, 16
      %v1290 = vrot.slane %v1288, 5
      %v1291 = vor.u32 %v1287, %v1290
      %v1292 = vrot.slane %v1291, 4
      %v1294 = vshll.u32 %v1209, 16
      %v1296 = vrot.slane %v1294, 5
      %v1297 = vsel %vm472, %v1292, %v1296
      %v1299 = vshrl.u32 %v1210, 16
      %v1301 = vrot.slane %v1299, 4
      %v1302 = vshll.u32 %v1210, 16
      %v1304 = vrot.slane %v1302, 5
      %v1305 = vor.u32 %v1301, %v1304
      %v1306 = vrot.slane %v1305, 4
      %v1308 = vshll.u32 %v1211, 16
      %v1310 = vrot.slane %v1308, 5
      %v1311 = vsel %vm472, %v1306, %v1310
      %v1313 = vshrl.u32 %v1212, 16
      %v1315 = vrot.slane %v1313, 4
      %v1316 = vshll.u32 %v1212, 16
      %v1318 = vrot.slane %v1316, 5
      %v1319 = vor.u32 %v1315, %v1318
      %v1320 = vrot.slane %v1319, 4
      %v1322 = vshll.u32 %v1213, 16
      %v1324 = vrot.slane %v1322, 5
      %v1325 = vsel %vm472, %v1320, %v1324
      %s1326 = scalar_lea.vmem %s1, 16
      %v1327 = vld [vmem:[%s1326] sm:$0x3]
      %v1328 = vunpack.c.l.b16 %v1227
      %v1329 = vunpack.c.l.b16 %v1241
      %v1330 = vunpack.c.l.b16 %v1255
      %v1331 = vunpack.c.l.b16 %v1269
      %v1332 = vunpack.c.l.b16 %v1283
      %v1333 = vunpack.c.l.b16 %v1297
      %v1334 = vunpack.c.l.b16 %v1311
      %v1335 = vunpack.c.l.b16 %v1325
      %v1336 = vpack.c.b16 %v1329, %v1328
      %v1337 = vpack.c.b16 %v1331, %v1330
      %v1338 = vpack.c.b16 %v1333, %v1332
      %v1339 = vpack.c.b16 %v1335, %v1334
      %v1341 = vsel %vm292, %v1336, 0
      %v1344 = vsel %vm292, %v1337, 0
      %v1347 = vsel %vm292, %v1338, 0
      %v1350 = vsel %vm292, %v1339, 0
      %v1353 = vsel %vm305, %v1327, 0
      %1355 = vmatprep.subr.bf16.mxu0 0
      %1356 = vmatpush1.bf16.msra.mxu0 0
      %1357 = vmatprep.subr.bf16.mxu0 0
      %1358 = vmatpush1.bf16.msra.mxu0 0
      %1359 = vmatprep.subr.bf16.mxu0 0
      %1360 = vmatpush1.bf16.msra.mxu0 0
      %1361 = vmatprep.subr.bf16.mxu0 0
      %1362 = vmatpush1.bf16.msra.mxu0 0
      %1363 = vmatprep.subr.bf16.mxu0 0
      %1364 = vmatpush1.bf16.msra.mxu0 0
      %1365 = vmatprep.subr.bf16.mxu0 0
      %1366 = vmatpush1.bf16.msra.mxu0 0
      %1367 = vmatprep.subr.bf16.mxu0 0
      %1368 = vmatpush1.bf16.msra.mxu0 0
      %1369 = vmatprep.subr.bf16.mxu0 0
      %1370 = vmatpush1.bf16.msra.mxu0 %v1353
      %1371 = vmatprep.subr.bf16.mxu0 0
      %1372 = vmatpush2.bf16.msra.mxu0 0
      %1373 = vmatprep.subr.bf16.mxu0 0
      %1374 = vmatpush2.bf16.msra.mxu0 0
      %1375 = vmatprep.subr.bf16.mxu0 0
      %1376 = vmatpush2.bf16.msra.mxu0 0
      %1377 = vmatprep.subr.bf16.mxu0 0
      %1378 = vmatpush2.bf16.msra.mxu0 0
      %1379 = vmatprep.subr.bf16.mxu0 0
      %1380 = vmatpush2.bf16.msra.mxu0 0
      %1381 = vmatprep.subr.bf16.mxu0 0
      %1382 = vmatpush2.bf16.msra.mxu0 0
      %1383 = vmatprep.subr.bf16.mxu0 0
      %1384 = vmatpush2.bf16.msra.mxu0 0
      %1385 = vmatprep.subr.bf16.mxu0 0
      %1386 = vmatpush2.bf16.msra.mxu0 0
      %1387 = vmatprep.mubr.bf16.mxu0 0
      %1388 = vmatmul.mubr.bf16.gmra.mxu0 %v1341
      %v1389 = vpop.f32.mrf.mxu0
      %v1390 = vadd.f32 0.0, %v1389
      %v1391 = vpop.f32.mrf.mxu0
      %v1392 = vpop.f32.mrf.mxu0
      %v1393 = vadd.f32 0.0, %v1392
      %v1394 = vpop.f32.mrf.mxu0
      %1395 = vmatprep.mubr.bf16.mxu0 0
      %1396 = vmatmul.mubr.bf16.gmra.mxu0 %v1344
      %v1397 = vpop.f32.mrf.mxu0
      %v1398 = vadd.f32 0.0, %v1397
      %v1399 = vpop.f32.mrf.mxu0
      %v1400 = vpop.f32.mrf.mxu0
      %v1401 = vadd.f32 0.0, %v1400
      %v1402 = vpop.f32.mrf.mxu0
      %1403 = vmatprep.mubr.bf16.mxu0 0
      %1404 = vmatmul.mubr.bf16.gmra.mxu0 %v1347
      %v1405 = vpop.f32.mrf.mxu0
      %v1406 = vadd.f32 0.0, %v1405
      %v1407 = vpop.f32.mrf.mxu0
      %v1408 = vpop.f32.mrf.mxu0
      %v1409 = vadd.f32 0.0, %v1408
      %v1410 = vpop.f32.mrf.mxu0
      %1411 = vmatprep.mubr.bf16.mxu0 0
      %1412 = vmatmul.mubr.bf16.gmra.mxu0 %v1350
      %v1413 = vpop.f32.mrf.mxu0
      %v1414 = vadd.f32 0.0, %v1413
      %v1415 = vpop.f32.mrf.mxu0
      %v1416 = vpop.f32.mrf.mxu0
      %v1417 = vadd.f32 0.0, %v1416
      %v1418 = vpop.f32.mrf.mxu0
      %1419 = vdwg.mxu0
      %v1420 = vadd.f32 %v1190, %v1390
      %v1421 = vadd.f32 %v1191, %v1393
      %v1422 = vadd.f32 %v1192, %v1398
      %v1423 = vadd.f32 %v1193, %v1401
      %v1424 = vadd.f32 %v1194, %v1406
      %v1425 = vadd.f32 %v1195, %v1409
      %v1426 = vadd.f32 %v1196, %v1414
      %v1427 = vadd.f32 %v1197, %v1417
      %v1428 = vld [vmem:[%s2] sm:$0x1]
      %v1430 = vlaneseq
      %v1431 = vshrl.u32 %v1430, 7
      %v1432 = vsub.s32 0, %v1431
      %v1433 = vrot.slane %v1428, %v1432
      %v1435 = vadd.f32 %v1420, %v1433
      %v1436 = vadd.f32 %v1421, %v1433
      %v1437 = vadd.f32 %v1422, %v1433
      %v1438 = vadd.f32 %v1423, %v1433
      %v1439 = vadd.f32 %v1424, %v1433
      %v1440 = vadd.f32 %v1425, %v1433
      %v1441 = vadd.f32 %v1426, %v1433
      %v1442 = vadd.f32 %v1427, %v1433
      %v1443 = vmax.f32 %v1435, 0.0
      %v1444 = vmax.f32 %v1436, 0.0
      %v1445 = vmax.f32 %v1437, 0.0
      %v1446 = vmax.f32 %v1438, 0.0
      %v1447 = vmax.f32 %v1439, 0.0
      %v1448 = vmax.f32 %v1440, 0.0
      %v1449 = vmax.f32 %v1441, 0.0
      %v1450 = vmax.f32 %v1442, 0.0
      %vm1451 = vcmask 64512
      %1452 = vst.msk [vmem:[#allocation2] sm:$0xff] %vm1451, 0.0
      %1453 = vst.msk [vmem:[#allocation2 + $0x8] sm:$0xff] %vm1451, 0.0
      %1454 = vst.msk [vmem:[#allocation2 + $0x10] sm:$0xff] %vm1451, 0.0
      %1455 = vst.msk [vmem:[#allocation2 + $0x18] sm:$0xff] %vm1451, 0.0
      %1456 = vst.msk [vmem:[#allocation2 + $0x20] sm:$0xff] %vm1451, 0.0
      %1457 = vst.msk [vmem:[#allocation2 + $0x28] sm:$0xff] %vm1451, 0.0
      %1458 = vst.msk [vmem:[#allocation2 + $0x30] sm:$0xff] %vm1451, 0.0
      %1459 = vst.msk [vmem:[#allocation2 + $0x38] sm:$0xff] %vm1451, 0.0
      %1460 = vst.msk [vmem:[#allocation2 + $0x40] sm:$0xff] %vm1451, 0.0
      %1461 = vst.msk [vmem:[#allocation2 + $0x48] sm:$0xff] %vm1451, 0.0
      %1462 = vst.msk [vmem:[#allocation2 + $0x50] sm:$0xff] %vm1451, 0.0
      %1463 = vst.msk [vmem:[#allocation2 + $0x58] sm:$0xff] %vm1451, 0.0
      %1464 = vst.msk [vmem:[#allocation2 + $0x60] sm:$0xff] %vm1451, 0.0
      %1465 = vst.msk [vmem:[#allocation2 + $0x68] sm:$0xff] %vm1451, 0.0
      %1466 = vst.msk [vmem:[#allocation2 + $0x70] sm:$0xff] %vm1451, 0.0
      %1467 = vst.msk [vmem:[#allocation2 + $0x78] sm:$0xff] %vm1451, 0.0
      %1468 = vst.msk [vmem:[#allocation2 + $0x80] sm:$0xff] %vm1451, 0.0
      %1469 = vst.msk [vmem:[#allocation2 + $0x88] sm:$0xff] %vm1451, 0.0
      %1470 = vst.msk [vmem:[#allocation2 + $0x90] sm:$0xff] %vm1451, 0.0
      %1471 = vst.msk [vmem:[#allocation2 + $0x98] sm:$0xff] %vm1451, 0.0
      %1472 = vst.msk [vmem:[#allocation2 + $0xa0] sm:$0xff] %vm1451, 0.0
      %1473 = vst.msk [vmem:[#allocation2 + $0xa8] sm:$0xff] %vm1451, 0.0
      %1474 = vst.msk [vmem:[#allocation2 + $0xb0] sm:$0xff] %vm1451, 0.0
      %1475 = vst.msk [vmem:[#allocation2 + $0xb8] sm:$0xff] %vm1451, 0.0
      %1476 = vst.msk [vmem:[#allocation2 + $0xc0] sm:$0xff] %vm1451, 0.0
      %1477 = vst.msk [vmem:[#allocation2 + $0xc8] sm:$0xff] %vm1451, 0.0
      %1478 = vst.msk [vmem:[#allocation2 + $0xd0] sm:$0xff] %vm1451, 0.0
      %1479 = vst.msk [vmem:[#allocation2 + $0xd8] sm:$0xff] %vm1451, 0.0
      %1480 = vst.msk [vmem:[#allocation2 + $0xe0] sm:$0xff] %vm1451, 0.0
      %1481 = vst.msk [vmem:[#allocation2 + $0xe8] sm:$0xff] %vm1451, 0.0
      %s1482 = scalar_lea.vmem [#allocation2], 24
      %1483 = vst.msk [vmem:[%s1482 + $0x8] sm:$0xff] %vm1451, %v1443
      %1484 = vst.msk [vmem:[%s1482 + $0x20] sm:$0xff] %vm1451, %v1444
      %1485 = vst.msk [vmem:[%s1482 + $0x38] sm:$0xff] %vm1451, %v1445
      %1486 = vst.msk [vmem:[%s1482 + $0x50] sm:$0xff] %vm1451, %v1446
      %1487 = vst.msk [vmem:[%s1482 + $0x68] sm:$0xff] %vm1451, %v1447
      %1488 = vst.msk [vmem:[%s1482 + $0x80] sm:$0xff] %vm1451, %v1448
      %1489 = vst.msk [vmem:[%s1482 + $0x98] sm:$0xff] %vm1451, %v1449
      %1490 = vst.msk [vmem:[%s1482 + $0xb0] sm:$0xff] %vm1451, %v1450
      %v1491 = vld [vmem:[%s246] sm:$0xf]
      %v1492 = vld [vmem:[%s246 + $0x8] sm:$0xf]
      %v1493 = vld [vmem:[%s246 + $0x10] sm:$0xf]
      %v1494 = vld [vmem:[%s246 + $0x18] sm:$0xf]
      %v1495 = vld [vmem:[%s246 + $0x20] sm:$0xf]
      %v1496 = vld [vmem:[%s246 + $0x28] sm:$0xf]
      %v1497 = vld [vmem:[%s246 + $0x30] sm:$0xf]
      %v1498 = vld [vmem:[%s246 + $0x38] sm:$0xf]
      %v1499 = vld [vmem:[%s4] sm:$0x3]
      %v1500 = vld [vmem:[#allocation2 + $0x7] sm:$0xff]
      %v1501 = vld [vmem:[#allocation2 + $0x1f] sm:$0xff]
      %v1502 = vld [vmem:[#allocation2 + $0x37] sm:$0xff]
      %v1503 = vld [vmem:[#allocation2 + $0x4f] sm:$0xff]
      %v1504 = vld [vmem:[#allocation2 + $0x67] sm:$0xff]
      %v1505 = vld [vmem:[#allocation2 + $0x7f] sm:$0xff]
      %v1506 = vld [vmem:[#allocation2 + $0x97] sm:$0xff]
      %v1507 = vld [vmem:[#allocation2 + $0xaf] sm:$0xff]
      %v1508 = vpack.c.bf16 %v1500, %v1500
      %v1509 = vpack.c.bf16 %v1501, %v1501
      %v1510 = vpack.c.bf16 %v1502, %v1502
      %v1511 = vpack.c.bf16 %v1503, %v1503
      %v1512 = vpack.c.bf16 %v1504, %v1504
      %v1513 = vpack.c.bf16 %v1505, %v1505
      %v1514 = vpack.c.bf16 %v1506, %v1506
      %v1515 = vpack.c.bf16 %v1507, %v1507
      %v1516 = vld [vmem:[%s3] sm:$0xf]
      %v1525 = vunpack.c.l.b16 %v1508
      %v1526 = vunpack.c.l.b16 %v1509
      %v1527 = vunpack.c.l.b16 %v1510
      %v1528 = vunpack.c.l.b16 %v1511
      %v1529 = vunpack.c.l.b16 %v1512
      %v1530 = vunpack.c.l.b16 %v1513
      %v1531 = vunpack.c.l.b16 %v1514
      %v1532 = vunpack.c.l.b16 %v1515
      %v1533 = vpack.c.b16 %v1526, %v1525
      %v1534 = vpack.c.b16 %v1528, %v1527
      %v1535 = vpack.c.b16 %v1530, %v1529
      %v1536 = vpack.c.b16 %v1532, %v1531
      %v1538 = vsel %vm1451, %v1533, 0
      %v1541 = vsel %vm1451, %v1534, 0
      %v1544 = vsel %vm1451, %v1535, 0
      %v1547 = vsel %vm1451, %v1536, 0
      %vm1549 = vcmask 1043456
      %v1551 = vsel %vm1549, %v1516, 0
      %1553 = vmatprep.subr.bf16.mxu0 0
      %1554 = vmatpush1.bf16.msra.mxu0 0
      %1555 = vmatprep.subr.bf16.mxu0 0
      %1556 = vmatpush1.bf16.msra.mxu0 0
      %1557 = vmatprep.subr.bf16.mxu0 0
      %1558 = vmatpush1.bf16.msra.mxu0 0
      %1559 = vmatprep.subr.bf16.mxu0 0
      %1560 = vmatpush1.bf16.msra.mxu0 0
      %1561 = vmatprep.subr.bf16.mxu0 0
      %1562 = vmatpush1.bf16.msra.mxu0 0
      %1563 = vmatprep.subr.bf16.mxu0 0
      %1564 = vmatpush1.bf16.msra.mxu0 0
      %1565 = vmatprep.subr.bf16.mxu0 0
      %1566 = vmatpush1.bf16.msra.mxu0 0
      %1567 = vmatprep.subr.bf16.mxu0 0
      %1568 = vmatpush1.bf16.msra.mxu0 %v1551
      %1569 = vmatprep.subr.bf16.mxu0 0
      %1570 = vmatpush2.bf16.msra.mxu0 0
      %1571 = vmatprep.subr.bf16.mxu0 0
      %1572 = vmatpush2.bf16.msra.mxu0 0
      %1573 = vmatprep.subr.bf16.mxu0 0
      %1574 = vmatpush2.bf16.msra.mxu0 0
      %1575 = vmatprep.subr.bf16.mxu0 0
      %1576 = vmatpush2.bf16.msra.mxu0 0
      %1577 = vmatprep.subr.bf16.mxu0 0
      %1578 = vmatpush2.bf16.msra.mxu0 0
      %1579 = vmatprep.subr.bf16.mxu0 0
      %1580 = vmatpush2.bf16.msra.mxu0 0
      %1581 = vmatprep.subr.bf16.mxu0 0
      %1582 = vmatpush2.bf16.msra.mxu0 0
      %1583 = vmatprep.subr.bf16.mxu0 0
      %1584 = vmatpush2.bf16.msra.mxu0 0
      %1585 = vmatprep.mubr.bf16.mxu0 0
      %1586 = vmatmul.mubr.bf16.gmra.mxu0 %v1538
      %v1587 = vpop.f32.mrf.mxu0
      %v1588 = vadd.f32 0.0, %v1587
      %v1589 = vpop.f32.mrf.mxu0
      %v1590 = vpop.f32.mrf.mxu0
      %v1591 = vadd.f32 0.0, %v1590
      %v1592 = vpop.f32.mrf.mxu0
      %1593 = vmatprep.mubr.bf16.mxu0 0
      %1594 = vmatmul.mubr.bf16.gmra.mxu0 %v1541
      %v1595 = vpop.f32.mrf.mxu0
      %v1596 = vadd.f32 0.0, %v1595
      %v1597 = vpop.f32.mrf.mxu0
      %v1598 = vpop.f32.mrf.mxu0
      %v1599 = vadd.f32 0.0, %v1598
      %v1600 = vpop.f32.mrf.mxu0
      %1601 = vmatprep.mubr.bf16.mxu0 0
      %1602 = vmatmul.mubr.bf16.gmra.mxu0 %v1544
      %v1603 = vpop.f32.mrf.mxu0
      %v1604 = vadd.f32 0.0, %v1603
      %v1605 = vpop.f32.mrf.mxu0
      %v1606 = vpop.f32.mrf.mxu0
      %v1607 = vadd.f32 0.0, %v1606
      %v1608 = vpop.f32.mrf.mxu0
      %1609 = vmatprep.mubr.bf16.mxu0 0
      %1610 = vmatmul.mubr.bf16.gmra.mxu0 %v1547
      %v1611 = vpop.f32.mrf.mxu0
      %v1612 = vadd.f32 0.0, %v1611
      %v1613 = vpop.f32.mrf.mxu0
      %v1614 = vpop.f32.mrf.mxu0
      %v1615 = vadd.f32 0.0, %v1614
      %v1616 = vpop.f32.mrf.mxu0
      %1617 = vdwg.mxu0
      %v1626 = vunpack.c.l.b16 %v1491
      %v1627 = vunpack.c.l.b16 %v1492
      %v1628 = vunpack.c.l.b16 %v1493
      %v1629 = vunpack.c.l.b16 %v1494
      %v1630 = vunpack.c.l.b16 %v1495
      %v1631 = vunpack.c.l.b16 %v1496
      %v1632 = vunpack.c.l.b16 %v1497
      %v1633 = vunpack.c.l.b16 %v1498
      %v1634 = vpack.c.b16 %v1627, %v1626
      %v1635 = vpack.c.b16 %v1629, %v1628
      %v1636 = vpack.c.b16 %v1631, %v1630
      %v1637 = vpack.c.b16 %v1633, %v1632
      %1638 = vrot.lane.b32.xlu0 %v1634, 116
      %v1639 = vpop.permute.xlu0 %1638
      %1640 = vrot.lane.b32.xlu0 %v1635, 116
      %v1641 = vpop.permute.xlu0 %1640
      %1642 = vrot.lane.b32.xlu0 %v1636, 116
      %v1643 = vpop.permute.xlu0 %1642
      %1644 = vrot.lane.b32.xlu0 %v1637, 116
      %v1645 = vpop.permute.xlu0 %1644
      %v1647 = vsel %vm292, %v1639, 0
      %v1650 = vsel %vm292, %v1641, 0
      %v1653 = vsel %vm292, %v1643, 0
      %v1656 = vsel %vm292, %v1645, 0
      %v1659 = vsel %vm305, %v1499, 0
      %1661 = vmatprep.subr.bf16.mxu0 0
      %1662 = vmatpush1.bf16.msra.mxu0 0
      %1663 = vmatprep.subr.bf16.mxu0 0
      %1664 = vmatpush1.bf16.msra.mxu0 0
      %1665 = vmatprep.subr.bf16.mxu0 0
      %1666 = vmatpush1.bf16.msra.mxu0 0
      %1667 = vmatprep.subr.bf16.mxu0 0
      %1668 = vmatpush1.bf16.msra.mxu0 0
      %1669 = vmatprep.subr.bf16.mxu0 0
      %1670 = vmatpush1.bf16.msra.mxu0 0
      %1671 = vmatprep.subr.bf16.mxu0 0
      %1672 = vmatpush1.bf16.msra.mxu0 0
      %1673 = vmatprep.subr.bf16.mxu0 0
      %1674 = vmatpush1.bf16.msra.mxu0 0
      %1675 = vmatprep.subr.bf16.mxu0 0
      %1676 = vmatpush1.bf16.msra.mxu0 %v1659
      %1677 = vmatprep.subr.bf16.mxu0 0
      %1678 = vmatpush2.bf16.msra.mxu0 0
      %1679 = vmatprep.subr.bf16.mxu0 0
      %1680 = vmatpush2.bf16.msra.mxu0 0
      %1681 = vmatprep.subr.bf16.mxu0 0
      %1682 = vmatpush2.bf16.msra.mxu0 0
      %1683 = vmatprep.subr.bf16.mxu0 0
      %1684 = vmatpush2.bf16.msra.mxu0 0
      %1685 = vmatprep.subr.bf16.mxu0 0
      %1686 = vmatpush2.bf16.msra.mxu0 0
      %1687 = vmatprep.subr.bf16.mxu0 0
      %1688 = vmatpush2.bf16.msra.mxu0 0
      %1689 = vmatprep.subr.bf16.mxu0 0
      %1690 = vmatpush2.bf16.msra.mxu0 0
      %1691 = vmatprep.subr.bf16.mxu0 0
      %1692 = vmatpush2.bf16.msra.mxu0 0
      %1693 = vmatprep.mubr.bf16.mxu0 0
      %1694 = vmatmul.mubr.bf16.gmra.mxu0 %v1647
      %v1695 = vpop.f32.mrf.mxu0
      %v1696 = vadd.f32 %v1588, %v1695
      %v1697 = vpop.f32.mrf.mxu0
      %v1698 = vpop.f32.mrf.mxu0
      %v1699 = vadd.f32 %v1591, %v1698
      %v1700 = vpop.f32.mrf.mxu0
      %1701 = vmatprep.mubr.bf16.mxu0 0
      %1702 = vmatmul.mubr.bf16.gmra.mxu0 %v1650
      %v1703 = vpop.f32.mrf.mxu0
      %v1704 = vadd.f32 %v1596, %v1703
      %v1705 = vpop.f32.mrf.mxu0
      %v1706 = vpop.f32.mrf.mxu0
      %v1707 = vadd.f32 %v1599, %v1706
      %v1708 = vpop.f32.mrf.mxu0
      %1709 = vmatprep.mubr.bf16.mxu0 0
      %1710 = vmatmul.mubr.bf16.gmra.mxu0 %v1653
      %v1711 = vpop.f32.mrf.mxu0
      %v1712 = vadd.f32 %v1604, %v1711
      %v1713 = vpop.f32.mrf.mxu0
      %v1714 = vpop.f32.mrf.mxu0
      %v1715 = vadd.f32 %v1607, %v1714
      %v1716 = vpop.f32.mrf.mxu0
      %1717 = vmatprep.mubr.bf16.mxu0 0
      %1718 = vmatmul.mubr.bf16.gmra.mxu0 %v1656
      %v1719 = vpop.f32.mrf.mxu0
      %v1720 = vadd.f32 %v1612, %v1719
      %v1721 = vpop.f32.mrf.mxu0
      %v1722 = vpop.f32.mrf.mxu0
      %v1723 = vadd.f32 %v1615, %v1722
      %v1724 = vpop.f32.mrf.mxu0
      %1725 = vdwg.mxu0
      %v1726 = vld [vmem:[#allocation2 + $0x8] sm:$0xff]
      %v1727 = vld [vmem:[#allocation2 + $0x20] sm:$0xff]
      %v1728 = vld [vmem:[#allocation2 + $0x38] sm:$0xff]
      %v1729 = vld [vmem:[#allocation2 + $0x50] sm:$0xff]
      %v1730 = vld [vmem:[#allocation2 + $0x68] sm:$0xff]
      %v1731 = vld [vmem:[#allocation2 + $0x80] sm:$0xff]
      %v1732 = vld [vmem:[#allocation2 + $0x98] sm:$0xff]
      %v1733 = vld [vmem:[#allocation2 + $0xb0] sm:$0xff]
      %v1734 = vpack.c.bf16 %v1726, %v1726
      %v1735 = vpack.c.bf16 %v1727, %v1727
      %v1736 = vpack.c.bf16 %v1728, %v1728
      %v1737 = vpack.c.bf16 %v1729, %v1729
      %v1738 = vpack.c.bf16 %v1730, %v1730
      %v1739 = vpack.c.bf16 %v1731, %v1731
      %v1740 = vpack.c.bf16 %v1732, %v1732
      %v1741 = vpack.c.bf16 %v1733, %v1733
      %s1742 = scalar_lea.vmem %s3, 4
      %v1743 = vld [vmem:[%s1742] sm:$0xf]
      %v1752 = vunpack.c.l.b16 %v1734
      %v1753 = vunpack.c.l.b16 %v1735
      %v1754 = vunpack.c.l.b16 %v1736
      %v1755 = vunpack.c.l.b16 %v1737
      %v1756 = vunpack.c.l.b16 %v1738
      %v1757 = vunpack.c.l.b16 %v1739
      %v1758 = vunpack.c.l.b16 %v1740
      %v1759 = vunpack.c.l.b16 %v1741
      %v1760 = vpack.c.b16 %v1753, %v1752
      %v1761 = vpack.c.b16 %v1755, %v1754
      %v1762 = vpack.c.b16 %v1757, %v1756
      %v1763 = vpack.c.b16 %v1759, %v1758
      %v1765 = vsel %vm1451, %v1760, 0
      %v1768 = vsel %vm1451, %v1761, 0
      %v1771 = vsel %vm1451, %v1762, 0
      %v1774 = vsel %vm1451, %v1763, 0
      %v1777 = vsel %vm1549, %v1743, 0
      %1779 = vmatprep.subr.bf16.mxu0 0
      %1780 = vmatpush1.bf16.msra.mxu0 0
      %1781 = vmatprep.subr.bf16.mxu0 0
      %1782 = vmatpush1.bf16.msra.mxu0 0
      %1783 = vmatprep.subr.bf16.mxu0 0
      %1784 = vmatpush1.bf16.msra.mxu0 0
      %1785 = vmatprep.subr.bf16.mxu0 0
      %1786 = vmatpush1.bf16.msra.mxu0 0
      %1787 = vmatprep.subr.bf16.mxu0 0
      %1788 = vmatpush1.bf16.msra.mxu0 0
      %1789 = vmatprep.subr.bf16.mxu0 0
      %1790 = vmatpush1.bf16.msra.mxu0 0
      %1791 = vmatprep.subr.bf16.mxu0 0
      %1792 = vmatpush1.bf16.msra.mxu0 0
      %1793 = vmatprep.subr.bf16.mxu0 0
      %1794 = vmatpush1.bf16.msra.mxu0 %v1777
      %1795 = vmatprep.subr.bf16.mxu0 0
      %1796 = vmatpush2.bf16.msra.mxu0 0
      %1797 = vmatprep.subr.bf16.mxu0 0
      %1798 = vmatpush2.bf16.msra.mxu0 0
      %1799 = vmatprep.subr.bf16.mxu0 0
      %1800 = vmatpush2.bf16.msra.mxu0 0
      %1801 = vmatprep.subr.bf16.mxu0 0
      %1802 = vmatpush2.bf16.msra.mxu0 0
      %1803 = vmatprep.subr.bf16.mxu0 0
      %1804 = vmatpush2.bf16.msra.mxu0 0
      %1805 = vmatprep.subr.bf16.mxu0 0
      %1806 = vmatpush2.bf16.msra.mxu0 0
      %1807 = vmatprep.subr.bf16.mxu0 0
      %1808 = vmatpush2.bf16.msra.mxu0 0
      %1809 = vmatprep.subr.bf16.mxu0 0
      %1810 = vmatpush2.bf16.msra.mxu0 0
      %1811 = vmatprep.mubr.bf16.mxu0 0
      %1812 = vmatmul.mubr.bf16.gmra.mxu0 %v1765
      %v1813 = vpop.f32.mrf.mxu0
      %v1814 = vadd.f32 0.0, %v1813
      %v1815 = vpop.f32.mrf.mxu0
      %v1816 = vpop.f32.mrf.mxu0
      %v1817 = vadd.f32 0.0, %v1816
      %v1818 = vpop.f32.mrf.mxu0
      %1819 = vmatprep.mubr.bf16.mxu0 0
      %1820 = vmatmul.mubr.bf16.gmra.mxu0 %v1768
      %v1821 = vpop.f32.mrf.mxu0
      %v1822 = vadd.f32 0.0, %v1821
      %v1823 = vpop.f32.mrf.mxu0
      %v1824 = vpop.f32.mrf.mxu0
      %v1825 = vadd.f32 0.0, %v1824
      %v1826 = vpop.f32.mrf.mxu0
      %1827 = vmatprep.mubr.bf16.mxu0 0
      %1828 = vmatmul.mubr.bf16.gmra.mxu0 %v1771
      %v1829 = vpop.f32.mrf.mxu0
      %v1830 = vadd.f32 0.0, %v1829
      %v1831 = vpop.f32.mrf.mxu0
      %v1832 = vpop.f32.mrf.mxu0
      %v1833 = vadd.f32 0.0, %v1832
      %v1834 = vpop.f32.mrf.mxu0
      %1835 = vmatprep.mubr.bf16.mxu0 0
      %1836 = vmatmul.mubr.bf16.gmra.mxu0 %v1774
      %v1837 = vpop.f32.mrf.mxu0
      %v1838 = vadd.f32 0.0, %v1837
      %v1839 = vpop.f32.mrf.mxu0
      %v1840 = vpop.f32.mrf.mxu0
      %v1841 = vadd.f32 0.0, %v1840
      %v1842 = vpop.f32.mrf.mxu0
      %1843 = vdwg.mxu0
      %v1844 = vadd.f32 %v1696, %v1814
      %v1845 = vadd.f32 %v1699, %v1817
      %v1846 = vadd.f32 %v1704, %v1822
      %v1847 = vadd.f32 %v1707, %v1825
      %v1848 = vadd.f32 %v1712, %v1830
      %v1849 = vadd.f32 %v1715, %v1833
      %v1850 = vadd.f32 %v1720, %v1838
      %v1851 = vadd.f32 %v1723, %v1841
      %v1852 = vld [vmem:[#allocation2 + $0x9] sm:$0xff]
      %v1853 = vld [vmem:[#allocation2 + $0x21] sm:$0xff]
      %v1854 = vld [vmem:[#allocation2 + $0x39] sm:$0xff]
      %v1855 = vld [vmem:[#allocation2 + $0x51] sm:$0xff]
      %v1856 = vld [vmem:[#allocation2 + $0x69] sm:$0xff]
      %v1857 = vld [vmem:[#allocation2 + $0x81] sm:$0xff]
      %v1858 = vld [vmem:[#allocation2 + $0x99] sm:$0xff]
      %v1859 = vld [vmem:[#allocation2 + $0xb1] sm:$0xff]
      %v1860 = vpack.c.bf16 %v1852, %v1852
      %v1861 = vpack.c.bf16 %v1853, %v1853
      %v1862 = vpack.c.bf16 %v1854, %v1854
      %v1863 = vpack.c.bf16 %v1855, %v1855
      %v1864 = vpack.c.bf16 %v1856, %v1856
      %v1865 = vpack.c.bf16 %v1857, %v1857
      %v1866 = vpack.c.bf16 %v1858, %v1858
      %v1867 = vpack.c.bf16 %v1859, %v1859
      %s1868 = scalar_lea.vmem %s3, 8
      %v1869 = vld [vmem:[%s1868] sm:$0xf]
      %v1878 = vunpack.c.l.b16 %v1860
      %v1879 = vunpack.c.l.b16 %v1861
      %v1880 = vunpack.c.l.b16 %v1862
      %v1881 = vunpack.c.l.b16 %v1863
      %v1882 = vunpack.c.l.b16 %v1864
      %v1883 = vunpack.c.l.b16 %v1865
      %v1884 = vunpack.c.l.b16 %v1866
      %v1885 = vunpack.c.l.b16 %v1867
      %v1886 = vpack.c.b16 %v1879, %v1878
      %v1887 = vpack.c.b16 %v1881, %v1880
      %v1888 = vpack.c.b16 %v1883, %v1882
      %v1889 = vpack.c.b16 %v1885, %v1884
      %v1891 = vsel %vm1451, %v1886, 0
      %v1894 = vsel %vm1451, %v1887, 0
      %v1897 = vsel %vm1451, %v1888, 0
      %v1900 = vsel %vm1451, %v1889, 0
      %v1903 = vsel %vm1549, %v1869, 0
      %1905 = vmatprep.subr.bf16.mxu0 0
      %1906 = vmatpush1.bf16.msra.mxu0 0
      %1907 = vmatprep.subr.bf16.mxu0 0
      %1908 = vmatpush1.bf16.msra.mxu0 0
      %1909 = vmatprep.subr.bf16.mxu0 0
      %1910 = vmatpush1.bf16.msra.mxu0 0
      %1911 = vmatprep.subr.bf16.mxu0 0
      %1912 = vmatpush1.bf16.msra.mxu0 0
      %1913 = vmatprep.subr.bf16.mxu0 0
      %1914 = vmatpush1.bf16.msra.mxu0 0
      %1915 = vmatprep.subr.bf16.mxu0 0
      %1916 = vmatpush1.bf16.msra.mxu0 0
      %1917 = vmatprep.subr.bf16.mxu0 0
      %1918 = vmatpush1.bf16.msra.mxu0 0
      %1919 = vmatprep.subr.bf16.mxu0 0
      %1920 = vmatpush1.bf16.msra.mxu0 %v1903
      %1921 = vmatprep.subr.bf16.mxu0 0
      %1922 = vmatpush2.bf16.msra.mxu0 0
      %1923 = vmatprep.subr.bf16.mxu0 0
      %1924 = vmatpush2.bf16.msra.mxu0 0
      %1925 = vmatprep.subr.bf16.mxu0 0
      %1926 = vmatpush2.bf16.msra.mxu0 0
      %1927 = vmatprep.subr.bf16.mxu0 0
      %1928 = vmatpush2.bf16.msra.mxu0 0
      %1929 = vmatprep.subr.bf16.mxu0 0
      %1930 = vmatpush2.bf16.msra.mxu0 0
      %1931 = vmatprep.subr.bf16.mxu0 0
      %1932 = vmatpush2.bf16.msra.mxu0 0
      %1933 = vmatprep.subr.bf16.mxu0 0
      %1934 = vmatpush2.bf16.msra.mxu0 0
      %1935 = vmatprep.subr.bf16.mxu0 0
      %1936 = vmatpush2.bf16.msra.mxu0 0
      %1937 = vmatprep.mubr.bf16.mxu0 0
      %1938 = vmatmul.mubr.bf16.gmra.mxu0 %v1891
      %v1939 = vpop.f32.mrf.mxu0
      %v1940 = vadd.f32 0.0, %v1939
      %v1941 = vpop.f32.mrf.mxu0
      %v1942 = vpop.f32.mrf.mxu0
      %v1943 = vadd.f32 0.0, %v1942
      %v1944 = vpop.f32.mrf.mxu0
      %1945 = vmatprep.mubr.bf16.mxu0 0
      %1946 = vmatmul.mubr.bf16.gmra.mxu0 %v1894
      %v1947 = vpop.f32.mrf.mxu0
      %v1948 = vadd.f32 0.0, %v1947
      %v1949 = vpop.f32.mrf.mxu0
      %v1950 = vpop.f32.mrf.mxu0
      %v1951 = vadd.f32 0.0, %v1950
      %v1952 = vpop.f32.mrf.mxu0
      %1953 = vmatprep.mubr.bf16.mxu0 0
      %1954 = vmatmul.mubr.bf16.gmra.mxu0 %v1897
      %v1955 = vpop.f32.mrf.mxu0
      %v1956 = vadd.f32 0.0, %v1955
      %v1957 = vpop.f32.mrf.mxu0
      %v1958 = vpop.f32.mrf.mxu0
      %v1959 = vadd.f32 0.0, %v1958
      %v1960 = vpop.f32.mrf.mxu0
      %1961 = vmatprep.mubr.bf16.mxu0 0
      %1962 = vmatmul.mubr.bf16.gmra.mxu0 %v1900
      %v1963 = vpop.f32.mrf.mxu0
      %v1964 = vadd.f32 0.0, %v1963
      %v1965 = vpop.f32.mrf.mxu0
      %v1966 = vpop.f32.mrf.mxu0
      %v1967 = vadd.f32 0.0, %v1966
      %v1968 = vpop.f32.mrf.mxu0
      %1969 = vdwg.mxu0
      %v1970 = vadd.f32 %v1844, %v1940
      %v1971 = vadd.f32 %v1845, %v1943
      %v1972 = vadd.f32 %v1846, %v1948
      %v1973 = vadd.f32 %v1847, %v1951
      %v1974 = vadd.f32 %v1848, %v1956
      %v1975 = vadd.f32 %v1849, %v1959
      %v1976 = vadd.f32 %v1850, %v1964
      %v1977 = vadd.f32 %v1851, %v1967
      %v1978 = vld [vmem:[%s1482 + $0x7] sm:$0xff]
      %v1979 = vld [vmem:[%s1482 + $0x1f] sm:$0xff]
      %v1980 = vld [vmem:[%s1482 + $0x37] sm:$0xff]
      %v1981 = vld [vmem:[%s1482 + $0x4f] sm:$0xff]
      %v1982 = vld [vmem:[%s1482 + $0x67] sm:$0xff]
      %v1983 = vld [vmem:[%s1482 + $0x7f] sm:$0xff]
      %v1984 = vld [vmem:[%s1482 + $0x97] sm:$0xff]
      %v1985 = vld [vmem:[%s1482 + $0xaf] sm:$0xff]
      %v1986 = vpack.c.bf16 %v1978, %v1978
      %v1987 = vpack.c.bf16 %v1979, %v1979
      %v1988 = vpack.c.bf16 %v1980, %v1980
      %v1989 = vpack.c.bf16 %v1981, %v1981
      %v1990 = vpack.c.bf16 %v1982, %v1982
      %v1991 = vpack.c.bf16 %v1983, %v1983
      %v1992 = vpack.c.bf16 %v1984, %v1984
      %v1993 = vpack.c.bf16 %v1985, %v1985
      %s1994 = scalar_lea.vmem %s3, 12
      %v1995 = vld [vmem:[%s1994] sm:$0xf]
      %v2004 = vunpack.c.l.b16 %v1986
      %v2005 = vunpack.c.l.b16 %v1987
      %v2006 = vunpack.c.l.b16 %v1988
      %v2007 = vunpack.c.l.b16 %v1989
      %v2008 = vunpack.c.l.b16 %v1990
      %v2009 = vunpack.c.l.b16 %v1991
      %v2010 = vunpack.c.l.b16 %v1992
      %v2011 = vunpack.c.l.b16 %v1993
      %v2012 = vpack.c.b16 %v2005, %v2004
      %v2013 = vpack.c.b16 %v2007, %v2006
      %v2014 = vpack.c.b16 %v2009, %v2008
      %v2015 = vpack.c.b16 %v2011, %v2010
      %v2017 = vsel %vm1451, %v2012, 0
      %v2020 = vsel %vm1451, %v2013, 0
      %v2023 = vsel %vm1451, %v2014, 0
      %v2026 = vsel %vm1451, %v2015, 0
      %v2029 = vsel %vm1549, %v1995, 0
      %2031 = vmatprep.subr.bf16.mxu0 0
      %2032 = vmatpush1.bf16.msra.mxu0 0
      %2033 = vmatprep.subr.bf16.mxu0 0
      %2034 = vmatpush1.bf16.msra.mxu0 0
      %2035 = vmatprep.subr.bf16.mxu0 0
      %2036 = vmatpush1.bf16.msra.mxu0 0
      %2037 = vmatprep.subr.bf16.mxu0 0
      %2038 = vmatpush1.bf16.msra.mxu0 0
      %2039 = vmatprep.subr.bf16.mxu0 0
      %2040 = vmatpush1.bf16.msra.mxu0 0
      %2041 = vmatprep.subr.bf16.mxu0 0
      %2042 = vmatpush1.bf16.msra.mxu0 0
      %2043 = vmatprep.subr.bf16.mxu0 0
      %2044 = vmatpush1.bf16.msra.mxu0 0
      %2045 = vmatprep.subr.bf16.mxu0 0
      %2046 = vmatpush1.bf16.msra.mxu0 %v2029
      %2047 = vmatprep.subr.bf16.mxu0 0
      %2048 = vmatpush2.bf16.msra.mxu0 0
      %2049 = vmatprep.subr.bf16.mxu0 0
      %2050 = vmatpush2.bf16.msra.mxu0 0
      %2051 = vmatprep.subr.bf16.mxu0 0
      %2052 = vmatpush2.bf16.msra.mxu0 0
      %2053 = vmatprep.subr.bf16.mxu0 0
      %2054 = vmatpush2.bf16.msra.mxu0 0
      %2055 = vmatprep.subr.bf16.mxu0 0
      %2056 = vmatpush2.bf16.msra.mxu0 0
      %2057 = vmatprep.subr.bf16.mxu0 0
      %2058 = vmatpush2.bf16.msra.mxu0 0
      %2059 = vmatprep.subr.bf16.mxu0 0
      %2060 = vmatpush2.bf16.msra.mxu0 0
      %2061 = vmatprep.subr.bf16.mxu0 0
      %2062 = vmatpush2.bf16.msra.mxu0 0
      %2063 = vmatprep.mubr.bf16.mxu0 0
      %2064 = vmatmul.mubr.bf16.gmra.mxu0 %v2017
      %v2065 = vpop.f32.mrf.mxu0
      %v2066 = vadd.f32 0.0, %v2065
      %v2067 = vpop.f32.mrf.mxu0
      %v2068 = vpop.f32.mrf.mxu0
      %v2069 = vadd.f32 0.0, %v2068
      %v2070 = vpop.f32.mrf.mxu0
      %2071 = vmatprep.mubr.bf16.mxu0 0
      %2072 = vmatmul.mubr.bf16.gmra.mxu0 %v2020
      %v2073 = vpop.f32.mrf.mxu0
      %v2074 = vadd.f32 0.0, %v2073
      %v2075 = vpop.f32.mrf.mxu0
      %v2076 = vpop.f32.mrf.mxu0
      %v2077 = vadd.f32 0.0, %v2076
      %v2078 = vpop.f32.mrf.mxu0
      %2079 = vmatprep.mubr.bf16.mxu0 0
      %2080 = vmatmul.mubr.bf16.gmra.mxu0 %v2023
      %v2081 = vpop.f32.mrf.mxu0
      %v2082 = vadd.f32 0.0, %v2081
      %v2083 = vpop.f32.mrf.mxu0
      %v2084 = vpop.f32.mrf.mxu0
      %v2085 = vadd.f32 0.0, %v2084
      %v2086 = vpop.f32.mrf.mxu0
      %2087 = vmatprep.mubr.bf16.mxu0 0
      %2088 = vmatmul.mubr.bf16.gmra.mxu0 %v2026
      %v2089 = vpop.f32.mrf.mxu0
      %v2090 = vadd.f32 0.0, %v2089
      %v2091 = vpop.f32.mrf.mxu0
      %v2092 = vpop.f32.mrf.mxu0
      %v2093 = vadd.f32 0.0, %v2092
      %v2094 = vpop.f32.mrf.mxu0
      %2095 = vdwg.mxu0
      %v2096 = vadd.f32 %v1970, %v2066
      %v2097 = vadd.f32 %v1971, %v2069
      %v2098 = vadd.f32 %v1972, %v2074
      %v2099 = vadd.f32 %v1973, %v2077
      %v2100 = vadd.f32 %v1974, %v2082
      %v2101 = vadd.f32 %v1975, %v2085
      %v2102 = vadd.f32 %v1976, %v2090
      %v2103 = vadd.f32 %v1977, %v2093
      %v2104 = vld [vmem:[%s1482 + $0x8] sm:$0xff]
      %v2105 = vld [vmem:[%s1482 + $0x20] sm:$0xff]
      %v2106 = vld [vmem:[%s1482 + $0x38] sm:$0xff]
      %v2107 = vld [vmem:[%s1482 + $0x50] sm:$0xff]
      %v2108 = vld [vmem:[%s1482 + $0x68] sm:$0xff]
      %v2109 = vld [vmem:[%s1482 + $0x80] sm:$0xff]
      %v2110 = vld [vmem:[%s1482 + $0x98] sm:$0xff]
      %v2111 = vld [vmem:[%s1482 + $0xb0] sm:$0xff]
      %v2112 = vpack.c.bf16 %v2104, %v2104
      %v2113 = vpack.c.bf16 %v2105, %v2105
      %v2114 = vpack.c.bf16 %v2106, %v2106
      %v2115 = vpack.c.bf16 %v2107, %v2107
      %v2116 = vpack.c.bf16 %v2108, %v2108
      %v2117 = vpack.c.bf16 %v2109, %v2109
      %v2118 = vpack.c.bf16 %v2110, %v2110
      %v2119 = vpack.c.bf16 %v2111, %v2111
      %s2120 = scalar_lea.vmem %s3, 16
      %v2121 = vld [vmem:[%s2120] sm:$0xf]
      %v2130 = vunpack.c.l.b16 %v2112
      %v2131 = vunpack.c.l.b16 %v2113
      %v2132 = vunpack.c.l.b16 %v2114
      %v2133 = vunpack.c.l.b16 %v2115
      %v2134 = vunpack.c.l.b16 %v2116
      %v2135 = vunpack.c.l.b16 %v2117
      %v2136 = vunpack.c.l.b16 %v2118
      %v2137 = vunpack.c.l.b16 %v2119
      %v2138 = vpack.c.b16 %v2131, %v2130
      %v2139 = vpack.c.b16 %v2133, %v2132
      %v2140 = vpack.c.b16 %v2135, %v2134
      %v2141 = vpack.c.b16 %v2137, %v2136
      %v2143 = vsel %vm1451, %v2138, 0
      %v2146 = vsel %vm1451, %v2139, 0
      %v2149 = vsel %vm1451, %v2140, 0
      %v2152 = vsel %vm1451, %v2141, 0
      %v2155 = vsel %vm1549, %v2121, 0
      %2157 = vmatprep.subr.bf16.mxu0 0
      %2158 = vmatpush1.bf16.msra.mxu0 0
      %2159 = vmatprep.subr.bf16.mxu0 0
      %2160 = vmatpush1.bf16.msra.mxu0 0
      %2161 = vmatprep.subr.bf16.mxu0 0
      %2162 = vmatpush1.bf16.msra.mxu0 0
      %2163 = vmatprep.subr.bf16.mxu0 0
      %2164 = vmatpush1.bf16.msra.mxu0 0
      %2165 = vmatprep.subr.bf16.mxu0 0
      %2166 = vmatpush1.bf16.msra.mxu0 0
      %2167 = vmatprep.subr.bf16.mxu0 0
      %2168 = vmatpush1.bf16.msra.mxu0 0
      %2169 = vmatprep.subr.bf16.mxu0 0
      %2170 = vmatpush1.bf16.msra.mxu0 0
      %2171 = vmatprep.subr.bf16.mxu0 0
      %2172 = vmatpush1.bf16.msra.mxu0 %v2155
      %2173 = vmatprep.subr.bf16.mxu0 0
      %2174 = vmatpush2.bf16.msra.mxu0 0
      %2175 = vmatprep.subr.bf16.mxu0 0
      %2176 = vmatpush2.bf16.msra.mxu0 0
      %2177 = vmatprep.subr.bf16.mxu0 0
      %2178 = vmatpush2.bf16.msra.mxu0 0
      %2179 = vmatprep.subr.bf16.mxu0 0
      %2180 = vmatpush2.bf16.msra.mxu0 0
      %2181 = vmatprep.subr.bf16.mxu0 0
      %2182 = vmatpush2.bf16.msra.mxu0 0
      %2183 = vmatprep.subr.bf16.mxu0 0
      %2184 = vmatpush2.bf16.msra.mxu0 0
      %2185 = vmatprep.subr.bf16.mxu0 0
      %2186 = vmatpush2.bf16.msra.mxu0 0
      %2187 = vmatprep.subr.bf16.mxu0 0
      %2188 = vmatpush2.bf16.msra.mxu0 0
      %2189 = vmatprep.mubr.bf16.mxu0 0
      %2190 = vmatmul.mubr.bf16.gmra.mxu0 %v2143
      %v2191 = vpop.f32.mrf.mxu0
      %v2192 = vadd.f32 0.0, %v2191
      %v2193 = vpop.f32.mrf.mxu0
      %v2194 = vpop.f32.mrf.mxu0
      %v2195 = vadd.f32 0.0, %v2194
      %v2196 = vpop.f32.mrf.mxu0
      %2197 = vmatprep.mubr.bf16.mxu0 0
      %2198 = vmatmul.mubr.bf16.gmra.mxu0 %v2146
      %v2199 = vpop.f32.mrf.mxu0
      %v2200 = vadd.f32 0.0, %v2199
      %v2201 = vpop.f32.mrf.mxu0
      %v2202 = vpop.f32.mrf.mxu0
      %v2203 = vadd.f32 0.0, %v2202
      %v2204 = vpop.f32.mrf.mxu0
      %2205 = vmatprep.mubr.bf16.mxu0 0
      %2206 = vmatmul.mubr.bf16.gmra.mxu0 %v2149
      %v2207 = vpop.f32.mrf.mxu0
      %v2208 = vadd.f32 0.0, %v2207
      %v2209 = vpop.f32.mrf.mxu0
      %v2210 = vpop.f32.mrf.mxu0
      %v2211 = vadd.f32 0.0, %v2210
      %v2212 = vpop.f32.mrf.mxu0
      %2213 = vmatprep.mubr.bf16.mxu0 0
      %2214 = vmatmul.mubr.bf16.gmra.mxu0 %v2152
      %v2215 = vpop.f32.mrf.mxu0
      %v2216 = vadd.f32 0.0, %v2215
      %v2217 = vpop.f32.mrf.mxu0
      %v2218 = vpop.f32.mrf.mxu0
      %v2219 = vadd.f32 0.0, %v2218
      %v2220 = vpop.f32.mrf.mxu0
      %2221 = vdwg.mxu0
      %v2222 = vadd.f32 %v2096, %v2192
      %v2223 = vadd.f32 %v2097, %v2195
      %v2224 = vadd.f32 %v2098, %v2200
      %v2225 = vadd.f32 %v2099, %v2203
      %v2226 = vadd.f32 %v2100, %v2208
      %v2227 = vadd.f32 %v2101, %v2211
      %v2228 = vadd.f32 %v2102, %v2216
      %v2229 = vadd.f32 %v2103, %v2219
      %v2230 = vld [vmem:[%s1482 + $0x9] sm:$0xff]
      %v2231 = vld [vmem:[%s1482 + $0x21] sm:$0xff]
      %v2232 = vld [vmem:[%s1482 + $0x39] sm:$0xff]
      %v2233 = vld [vmem:[%s1482 + $0x51] sm:$0xff]
      %v2234 = vld [vmem:[%s1482 + $0x69] sm:$0xff]
      %v2235 = vld [vmem:[%s1482 + $0x81] sm:$0xff]
      %v2236 = vld [vmem:[%s1482 + $0x99] sm:$0xff]
      %v2237 = vld [vmem:[%s1482 + $0xb1] sm:$0xff]
      %v2238 = vpack.c.bf16 %v2230, %v2230
      %v2239 = vpack.c.bf16 %v2231, %v2231
      %v2240 = vpack.c.bf16 %v2232, %v2232
      %v2241 = vpack.c.bf16 %v2233, %v2233
      %v2242 = vpack.c.bf16 %v2234, %v2234
      %v2243 = vpack.c.bf16 %v2235, %v2235
      %v2244 = vpack.c.bf16 %v2236, %v2236
      %v2245 = vpack.c.bf16 %v2237, %v2237
      %s2246 = scalar_lea.vmem %s3, 20
      %v2247 = vld [vmem:[%s2246] sm:$0xf]
      %v2256 = vunpack.c.l.b16 %v2238
      %v2257 = vunpack.c.l.b16 %v2239
      %v2258 = vunpack.c.l.b16 %v2240
      %v2259 = vunpack.c.l.b16 %v2241
      %v2260 = vunpack.c.l.b16 %v2242
      %v2261 = vunpack.c.l.b16 %v2243
      %v2262 = vunpack.c.l.b16 %v2244
      %v2263 = vunpack.c.l.b16 %v2245
      %v2264 = vpack.c.b16 %v2257, %v2256
      %v2265 = vpack.c.b16 %v2259, %v2258
      %v2266 = vpack.c.b16 %v2261, %v2260
      %v2267 = vpack.c.b16 %v2263, %v2262
      %v2269 = vsel %vm1451, %v2264, 0
      %v2272 = vsel %vm1451, %v2265, 0
      %v2275 = vsel %vm1451, %v2266, 0
      %v2278 = vsel %vm1451, %v2267, 0
      %v2281 = vsel %vm1549, %v2247, 0
      %2283 = vmatprep.subr.bf16.mxu0 0
      %2284 = vmatpush1.bf16.msra.mxu0 0
      %2285 = vmatprep.subr.bf16.mxu0 0
      %2286 = vmatpush1.bf16.msra.mxu0 0
      %2287 = vmatprep.subr.bf16.mxu0 0
      %2288 = vmatpush1.bf16.msra.mxu0 0
      %2289 = vmatprep.subr.bf16.mxu0 0
      %2290 = vmatpush1.bf16.msra.mxu0 0
      %2291 = vmatprep.subr.bf16.mxu0 0
      %2292 = vmatpush1.bf16.msra.mxu0 0
      %2293 = vmatprep.subr.bf16.mxu0 0
      %2294 = vmatpush1.bf16.msra.mxu0 0
      %2295 = vmatprep.subr.bf16.mxu0 0
      %2296 = vmatpush1.bf16.msra.mxu0 0
      %2297 = vmatprep.subr.bf16.mxu0 0
      %2298 = vmatpush1.bf16.msra.mxu0 %v2281
      %2299 = vmatprep.subr.bf16.mxu0 0
      %2300 = vmatpush2.bf16.msra.mxu0 0
      %2301 = vmatprep.subr.bf16.mxu0 0
      %2302 = vmatpush2.bf16.msra.mxu0 0
      %2303 = vmatprep.subr.bf16.mxu0 0
      %2304 = vmatpush2.bf16.msra.mxu0 0
      %2305 = vmatprep.subr.bf16.mxu0 0
      %2306 = vmatpush2.bf16.msra.mxu0 0
      %2307 = vmatprep.subr.bf16.mxu0 0
      %2308 = vmatpush2.bf16.msra.mxu0 0
      %2309 = vmatprep.subr.bf16.mxu0 0
      %2310 = vmatpush2.bf16.msra.mxu0 0
      %2311 = vmatprep.subr.bf16.mxu0 0
      %2312 = vmatpush2.bf16.msra.mxu0 0
      %2313 = vmatprep.subr.bf16.mxu0 0
      %2314 = vmatpush2.bf16.msra.mxu0 0
      %2315 = vmatprep.mubr.bf16.mxu0 0
      %2316 = vmatmul.mubr.bf16.gmra.mxu0 %v2269
      %v2317 = vpop.f32.mrf.mxu0
      %v2318 = vadd.f32 0.0, %v2317
      %v2319 = vpop.f32.mrf.mxu0
      %v2320 = vpop.f32.mrf.mxu0
      %v2321 = vadd.f32 0.0, %v2320
      %v2322 = vpop.f32.mrf.mxu0
      %2323 = vmatprep.mubr.bf16.mxu0 0
      %2324 = vmatmul.mubr.bf16.gmra.mxu0 %v2272
      %v2325 = vpop.f32.mrf.mxu0
      %v2326 = vadd.f32 0.0, %v2325
      %v2327 = vpop.f32.mrf.mxu0
      %v2328 = vpop.f32.mrf.mxu0
      %v2329 = vadd.f32 0.0, %v2328
      %v2330 = vpop.f32.mrf.mxu0
      %2331 = vmatprep.mubr.bf16.mxu0 0
      %2332 = vmatmul.mubr.bf16.gmra.mxu0 %v2275
      %v2333 = vpop.f32.mrf.mxu0
      %v2334 = vadd.f32 0.0, %v2333
      %v2335 = vpop.f32.mrf.mxu0
      %v2336 = vpop.f32.mrf.mxu0
      %v2337 = vadd.f32 0.0, %v2336
      %v2338 = vpop.f32.mrf.mxu0
      %2339 = vmatprep.mubr.bf16.mxu0 0
      %2340 = vmatmul.mubr.bf16.gmra.mxu0 %v2278
      %v2341 = vpop.f32.mrf.mxu0
      %v2342 = vadd.f32 0.0, %v2341
      %v2343 = vpop.f32.mrf.mxu0
      %v2344 = vpop.f32.mrf.mxu0
      %v2345 = vadd.f32 0.0, %v2344
      %v2346 = vpop.f32.mrf.mxu0
      %2347 = vdwg.mxu0
      %v2348 = vadd.f32 %v2222, %v2318
      %v2349 = vadd.f32 %v2223, %v2321
      %v2350 = vadd.f32 %v2224, %v2326
      %v2351 = vadd.f32 %v2225, %v2329
      %v2352 = vadd.f32 %v2226, %v2334
      %v2353 = vadd.f32 %v2227, %v2337
      %v2354 = vadd.f32 %v2228, %v2342
      %v2355 = vadd.f32 %v2229, %v2345
      %s2356 = scalar_lea.vmem [#allocation2], 48
      %v2357 = vld [vmem:[%s2356 + $0x7] sm:$0xff]
      %v2358 = vld [vmem:[%s2356 + $0x1f] sm:$0xff]
      %v2359 = vld [vmem:[%s2356 + $0x37] sm:$0xff]
      %v2360 = vld [vmem:[%s2356 + $0x4f] sm:$0xff]
      %v2361 = vld [vmem:[%s2356 + $0x67] sm:$0xff]
      %v2362 = vld [vmem:[%s2356 + $0x7f] sm:$0xff]
      %v2363 = vld [vmem:[%s2356 + $0x97] sm:$0xff]
      %v2364 = vld [vmem:[%s2356 + $0xaf] sm:$0xff]
      %v2365 = vpack.c.bf16 %v2357, %v2357
      %v2366 = vpack.c.bf16 %v2358, %v2358
      %v2367 = vpack.c.bf16 %v2359, %v2359
      %v2368 = vpack.c.bf16 %v2360, %v2360
      %v2369 = vpack.c.bf16 %v2361, %v2361
      %v2370 = vpack.c.bf16 %v2362, %v2362
      %v2371 = vpack.c.bf16 %v2363, %v2363
      %v2372 = vpack.c.bf16 %v2364, %v2364
      %s2373 = scalar_lea.vmem %s3, 24
      %v2374 = vld [vmem:[%s2373] sm:$0xf]
      %v2383 = vunpack.c.l.b16 %v2365
      %v2384 = vunpack.c.l.b16 %v2366
      %v2385 = vunpack.c.l.b16 %v2367
      %v2386 = vunpack.c.l.b16 %v2368
      %v2387 = vunpack.c.l.b16 %v2369
      %v2388 = vunpack.c.l.b16 %v2370
      %v2389 = vunpack.c.l.b16 %v2371
      %v2390 = vunpack.c.l.b16 %v2372
      %v2391 = vpack.c.b16 %v2384, %v2383
      %v2392 = vpack.c.b16 %v2386, %v2385
      %v2393 = vpack.c.b16 %v2388, %v2387
      %v2394 = vpack.c.b16 %v2390, %v2389
      %v2396 = vsel %vm1451, %v2391, 0
      %v2399 = vsel %vm1451, %v2392, 0
      %v2402 = vsel %vm1451, %v2393, 0
      %v2405 = vsel %vm1451, %v2394, 0
      %v2408 = vsel %vm1549, %v2374, 0
      %2410 = vmatprep.subr.bf16.mxu0 0
      %2411 = vmatpush1.bf16.msra.mxu0 0
      %2412 = vmatprep.subr.bf16.mxu0 0
      %2413 = vmatpush1.bf16.msra.mxu0 0
      %2414 = vmatprep.subr.bf16.mxu0 0
      %2415 = vmatpush1.bf16.msra.mxu0 0
      %2416 = vmatprep.subr.bf16.mxu0 0
      %2417 = vmatpush1.bf16.msra.mxu0 0
      %2418 = vmatprep.subr.bf16.mxu0 0
      %2419 = vmatpush1.bf16.msra.mxu0 0
      %2420 = vmatprep.subr.bf16.mxu0 0
      %2421 = vmatpush1.bf16.msra.mxu0 0
      %2422 = vmatprep.subr.bf16.mxu0 0
      %2423 = vmatpush1.bf16.msra.mxu0 0
      %2424 = vmatprep.subr.bf16.mxu0 0
      %2425 = vmatpush1.bf16.msra.mxu0 %v2408
      %2426 = vmatprep.subr.bf16.mxu0 0
      %2427 = vmatpush2.bf16.msra.mxu0 0
      %2428 = vmatprep.subr.bf16.mxu0 0
      %2429 = vmatpush2.bf16.msra.mxu0 0
      %2430 = vmatprep.subr.bf16.mxu0 0
      %2431 = vmatpush2.bf16.msra.mxu0 0
      %2432 = vmatprep.subr.bf16.mxu0 0
      %2433 = vmatpush2.bf16.msra.mxu0 0
      %2434 = vmatprep.subr.bf16.mxu0 0
      %2435 = vmatpush2.bf16.msra.mxu0 0
      %2436 = vmatprep.subr.bf16.mxu0 0
      %2437 = vmatpush2.bf16.msra.mxu0 0
      %2438 = vmatprep.subr.bf16.mxu0 0
      %2439 = vmatpush2.bf16.msra.mxu0 0
      %2440 = vmatprep.subr.bf16.mxu0 0
      %2441 = vmatpush2.bf16.msra.mxu0 0
      %2442 = vmatprep.mubr.bf16.mxu0 0
      %2443 = vmatmul.mubr.bf16.gmra.mxu0 %v2396
      %v2444 = vpop.f32.mrf.mxu0
      %v2445 = vadd.f32 0.0, %v2444
      %v2446 = vpop.f32.mrf.mxu0
      %v2447 = vpop.f32.mrf.mxu0
      %v2448 = vadd.f32 0.0, %v2447
      %v2449 = vpop.f32.mrf.mxu0
      %2450 = vmatprep.mubr.bf16.mxu0 0
      %2451 = vmatmul.mubr.bf16.gmra.mxu0 %v2399
      %v2452 = vpop.f32.mrf.mxu0
      %v2453 = vadd.f32 0.0, %v2452
      %v2454 = vpop.f32.mrf.mxu0
      %v2455 = vpop.f32.mrf.mxu0
      %v2456 = vadd.f32 0.0, %v2455
      %v2457 = vpop.f32.mrf.mxu0
      %2458 = vmatprep.mubr.bf16.mxu0 0
      %2459 = vmatmul.mubr.bf16.gmra.mxu0 %v2402
      %v2460 = vpop.f32.mrf.mxu0
      %v2461 = vadd.f32 0.0, %v2460
      %v2462 = vpop.f32.mrf.mxu0
      %v2463 = vpop.f32.mrf.mxu0
      %v2464 = vadd.f32 0.0, %v2463
      %v2465 = vpop.f32.mrf.mxu0
      %2466 = vmatprep.mubr.bf16.mxu0 0
      %2467 = vmatmul.mubr.bf16.gmra.mxu0 %v2405
      %v2468 = vpop.f32.mrf.mxu0
      %v2469 = vadd.f32 0.0, %v2468
      %v2470 = vpop.f32.mrf.mxu0
      %v2471 = vpop.f32.mrf.mxu0
      %v2472 = vadd.f32 0.0, %v2471
      %v2473 = vpop.f32.mrf.mxu0
      %2474 = vdwg.mxu0
      %v2475 = vadd.f32 %v2348, %v2445
      %v2476 = vadd.f32 %v2349, %v2448
      %v2477 = vadd.f32 %v2350, %v2453
      %v2478 = vadd.f32 %v2351, %v2456
      %v2479 = vadd.f32 %v2352, %v2461
      %v2480 = vadd.f32 %v2353, %v2464
      %v2481 = vadd.f32 %v2354, %v2469
      %v2482 = vadd.f32 %v2355, %v2472
      %v2483 = vld [vmem:[%s2356 + $0x8] sm:$0xff]
      %v2484 = vld [vmem:[%s2356 + $0x20] sm:$0xff]
      %v2485 = vld [vmem:[%s2356 + $0x38] sm:$0xff]
      %v2486 = vld [vmem:[%s2356 + $0x50] sm:$0xff]
      %v2487 = vld [vmem:[%s2356 + $0x68] sm:$0xff]
      %v2488 = vld [vmem:[%s2356 + $0x80] sm:$0xff]
      %v2489 = vld [vmem:[%s2356 + $0x98] sm:$0xff]
      %v2490 = vld [vmem:[%s2356 + $0xb0] sm:$0xff]
      %v2491 = vpack.c.bf16 %v2483, %v2483
      %v2492 = vpack.c.bf16 %v2484, %v2484
      %v2493 = vpack.c.bf16 %v2485, %v2485
      %v2494 = vpack.c.bf16 %v2486, %v2486
      %v2495 = vpack.c.bf16 %v2487, %v2487
      %v2496 = vpack.c.bf16 %v2488, %v2488
      %v2497 = vpack.c.bf16 %v2489, %v2489
      %v2498 = vpack.c.bf16 %v2490, %v2490
      %s2499 = scalar_lea.vmem %s3, 28
      %v2500 = vld [vmem:[%s2499] sm:$0xf]
      %v2509 = vunpack.c.l.b16 %v2491
      %v2510 = vunpack.c.l.b16 %v2492
      %v2511 = vunpack.c.l.b16 %v2493
      %v2512 = vunpack.c.l.b16 %v2494
      %v2513 = vunpack.c.l.b16 %v2495
      %v2514 = vunpack.c.l.b16 %v2496
      %v2515 = vunpack.c.l.b16 %v2497
      %v2516 = vunpack.c.l.b16 %v2498
      %v2517 = vpack.c.b16 %v2510, %v2509
      %v2518 = vpack.c.b16 %v2512, %v2511
      %v2519 = vpack.c.b16 %v2514, %v2513
      %v2520 = vpack.c.b16 %v2516, %v2515
      %v2522 = vsel %vm1451, %v2517, 0
      %v2525 = vsel %vm1451, %v2518, 0
      %v2528 = vsel %vm1451, %v2519, 0
      %v2531 = vsel %vm1451, %v2520, 0
      %v2534 = vsel %vm1549, %v2500, 0
      %2536 = vmatprep.subr.bf16.mxu0 0
      %2537 = vmatpush1.bf16.msra.mxu0 0
      %2538 = vmatprep.subr.bf16.mxu0 0
      %2539 = vmatpush1.bf16.msra.mxu0 0
      %2540 = vmatprep.subr.bf16.mxu0 0
      %2541 = vmatpush1.bf16.msra.mxu0 0
      %2542 = vmatprep.subr.bf16.mxu0 0
      %2543 = vmatpush1.bf16.msra.mxu0 0
      %2544 = vmatprep.subr.bf16.mxu0 0
      %2545 = vmatpush1.bf16.msra.mxu0 0
      %2546 = vmatprep.subr.bf16.mxu0 0
      %2547 = vmatpush1.bf16.msra.mxu0 0
      %2548 = vmatprep.subr.bf16.mxu0 0
      %2549 = vmatpush1.bf16.msra.mxu0 0
      %2550 = vmatprep.subr.bf16.mxu0 0
      %2551 = vmatpush1.bf16.msra.mxu0 %v2534
      %2552 = vmatprep.subr.bf16.mxu0 0
      %2553 = vmatpush2.bf16.msra.mxu0 0
      %2554 = vmatprep.subr.bf16.mxu0 0
      %2555 = vmatpush2.bf16.msra.mxu0 0
      %2556 = vmatprep.subr.bf16.mxu0 0
      %2557 = vmatpush2.bf16.msra.mxu0 0
      %2558 = vmatprep.subr.bf16.mxu0 0
      %2559 = vmatpush2.bf16.msra.mxu0 0
      %2560 = vmatprep.subr.bf16.mxu0 0
      %2561 = vmatpush2.bf16.msra.mxu0 0
      %2562 = vmatprep.subr.bf16.mxu0 0
      %2563 = vmatpush2.bf16.msra.mxu0 0
      %2564 = vmatprep.subr.bf16.mxu0 0
      %2565 = vmatpush2.bf16.msra.mxu0 0
      %2566 = vmatprep.subr.bf16.mxu0 0
      %2567 = vmatpush2.bf16.msra.mxu0 0
      %2568 = vmatprep.mubr.bf16.mxu0 0
      %2569 = vmatmul.mubr.bf16.gmra.mxu0 %v2522
      %v2570 = vpop.f32.mrf.mxu0
      %v2571 = vadd.f32 0.0, %v2570
      %v2572 = vpop.f32.mrf.mxu0
      %v2573 = vpop.f32.mrf.mxu0
      %v2574 = vadd.f32 0.0, %v2573
      %v2575 = vpop.f32.mrf.mxu0
      %2576 = vmatprep.mubr.bf16.mxu0 0
      %2577 = vmatmul.mubr.bf16.gmra.mxu0 %v2525
      %v2578 = vpop.f32.mrf.mxu0
      %v2579 = vadd.f32 0.0, %v2578
      %v2580 = vpop.f32.mrf.mxu0
      %v2581 = vpop.f32.mrf.mxu0
      %v2582 = vadd.f32 0.0, %v2581
      %v2583 = vpop.f32.mrf.mxu0
      %2584 = vmatprep.mubr.bf16.mxu0 0
      %2585 = vmatmul.mubr.bf16.gmra.mxu0 %v2528
      %v2586 = vpop.f32.mrf.mxu0
      %v2587 = vadd.f32 0.0, %v2586
      %v2588 = vpop.f32.mrf.mxu0
      %v2589 = vpop.f32.mrf.mxu0
      %v2590 = vadd.f32 0.0, %v2589
      %v2591 = vpop.f32.mrf.mxu0
      %2592 = vmatprep.mubr.bf16.mxu0 0
      %2593 = vmatmul.mubr.bf16.gmra.mxu0 %v2531
      %v2594 = vpop.f32.mrf.mxu0
      %v2595 = vadd.f32 0.0, %v2594
      %v2596 = vpop.f32.mrf.mxu0
      %v2597 = vpop.f32.mrf.mxu0
      %v2598 = vadd.f32 0.0, %v2597
      %v2599 = vpop.f32.mrf.mxu0
      %2600 = vdwg.mxu0
      %v2601 = vadd.f32 %v2475, %v2571
      %v2602 = vadd.f32 %v2476, %v2574
      %v2603 = vadd.f32 %v2477, %v2579
      %v2604 = vadd.f32 %v2478, %v2582
      %v2605 = vadd.f32 %v2479, %v2587
      %v2606 = vadd.f32 %v2480, %v2590
      %v2607 = vadd.f32 %v2481, %v2595
      %v2608 = vadd.f32 %v2482, %v2598
      %v2609 = vld [vmem:[%s2356 + $0x9] sm:$0xff]
      %v2610 = vld [vmem:[%s2356 + $0x21] sm:$0xff]
      %v2611 = vld [vmem:[%s2356 + $0x39] sm:$0xff]
      %v2612 = vld [vmem:[%s2356 + $0x51] sm:$0xff]
      %v2613 = vld [vmem:[%s2356 + $0x69] sm:$0xff]
      %v2614 = vld [vmem:[%s2356 + $0x81] sm:$0xff]
      %v2615 = vld [vmem:[%s2356 + $0x99] sm:$0xff]
      %v2616 = vld [vmem:[%s2356 + $0xb1] sm:$0xff]
      %v2617 = vpack.c.bf16 %v2609, %v2609
      %v2618 = vpack.c.bf16 %v2610, %v2610
      %v2619 = vpack.c.bf16 %v2611, %v2611
      %v2620 = vpack.c.bf16 %v2612, %v2612
      %v2621 = vpack.c.bf16 %v2613, %v2613
      %v2622 = vpack.c.bf16 %v2614, %v2614
      %v2623 = vpack.c.bf16 %v2615, %v2615
      %v2624 = vpack.c.bf16 %v2616, %v2616
      %s2625 = scalar_lea.vmem %s3, 32
      %v2626 = vld [vmem:[%s2625] sm:$0xf]
      %v2635 = vunpack.c.l.b16 %v2617
      %v2636 = vunpack.c.l.b16 %v2618
      %v2637 = vunpack.c.l.b16 %v2619
      %v2638 = vunpack.c.l.b16 %v2620
      %v2639 = vunpack.c.l.b16 %v2621
      %v2640 = vunpack.c.l.b16 %v2622
      %v2641 = vunpack.c.l.b16 %v2623
      %v2642 = vunpack.c.l.b16 %v2624
      %v2643 = vpack.c.b16 %v2636, %v2635
      %v2644 = vpack.c.b16 %v2638, %v2637
      %v2645 = vpack.c.b16 %v2640, %v2639
      %v2646 = vpack.c.b16 %v2642, %v2641
      %v2648 = vsel %vm1451, %v2643, 0
      %v2651 = vsel %vm1451, %v2644, 0
      %v2654 = vsel %vm1451, %v2645, 0
      %v2657 = vsel %vm1451, %v2646, 0
      %v2660 = vsel %vm1549, %v2626, 0
      %2662 = vmatprep.subr.bf16.mxu0 0
      %2663 = vmatpush1.bf16.msra.mxu0 0
      %2664 = vmatprep.subr.bf16.mxu0 0
      %2665 = vmatpush1.bf16.msra.mxu0 0
      %2666 = vmatprep.subr.bf16.mxu0 0
      %2667 = vmatpush1.bf16.msra.mxu0 0
      %2668 = vmatprep.subr.bf16.mxu0 0
      %2669 = vmatpush1.bf16.msra.mxu0 0
      %2670 = vmatprep.subr.bf16.mxu0 0
      %2671 = vmatpush1.bf16.msra.mxu0 0
      %2672 = vmatprep.subr.bf16.mxu0 0
      %2673 = vmatpush1.bf16.msra.mxu0 0
      %2674 = vmatprep.subr.bf16.mxu0 0
      %2675 = vmatpush1.bf16.msra.mxu0 0
      %2676 = vmatprep.subr.bf16.mxu0 0
      %2677 = vmatpush1.bf16.msra.mxu0 %v2660
      %2678 = vmatprep.subr.bf16.mxu0 0
      %2679 = vmatpush2.bf16.msra.mxu0 0
      %2680 = vmatprep.subr.bf16.mxu0 0
      %2681 = vmatpush2.bf16.msra.mxu0 0
      %2682 = vmatprep.subr.bf16.mxu0 0
      %2683 = vmatpush2.bf16.msra.mxu0 0
      %2684 = vmatprep.subr.bf16.mxu0 0
      %2685 = vmatpush2.bf16.msra.mxu0 0
      %2686 = vmatprep.subr.bf16.mxu0 0
      %2687 = vmatpush2.bf16.msra.mxu0 0
      %2688 = vmatprep.subr.bf16.mxu0 0
      %2689 = vmatpush2.bf16.msra.mxu0 0
      %2690 = vmatprep.subr.bf16.mxu0 0
      %2691 = vmatpush2.bf16.msra.mxu0 0
      %2692 = vmatprep.subr.bf16.mxu0 0
      %2693 = vmatpush2.bf16.msra.mxu0 0
      %2694 = vmatprep.mubr.bf16.mxu0 0
      %2695 = vmatmul.mubr.bf16.gmra.mxu0 %v2648
      %v2696 = vpop.f32.mrf.mxu0
      %v2697 = vadd.f32 0.0, %v2696
      %v2698 = vpop.f32.mrf.mxu0
      %v2699 = vpop.f32.mrf.mxu0
      %v2700 = vadd.f32 0.0, %v2699
      %v2701 = vpop.f32.mrf.mxu0
      %2702 = vmatprep.mubr.bf16.mxu0 0
      %2703 = vmatmul.mubr.bf16.gmra.mxu0 %v2651
      %v2704 = vpop.f32.mrf.mxu0
      %v2705 = vadd.f32 0.0, %v2704
      %v2706 = vpop.f32.mrf.mxu0
      %v2707 = vpop.f32.mrf.mxu0
      %v2708 = vadd.f32 0.0, %v2707
      %v2709 = vpop.f32.mrf.mxu0
      %2710 = vmatprep.mubr.bf16.mxu0 0
      %2711 = vmatmul.mubr.bf16.gmra.mxu0 %v2654
      %v2712 = vpop.f32.mrf.mxu0
      %v2713 = vadd.f32 0.0, %v2712
      %v2714 = vpop.f32.mrf.mxu0
      %v2715 = vpop.f32.mrf.mxu0
      %v2716 = vadd.f32 0.0, %v2715
      %v2717 = vpop.f32.mrf.mxu0
      %2718 = vmatprep.mubr.bf16.mxu0 0
      %2719 = vmatmul.mubr.bf16.gmra.mxu0 %v2657
      %v2720 = vpop.f32.mrf.mxu0
      %v2721 = vadd.f32 0.0, %v2720
      %v2722 = vpop.f32.mrf.mxu0
      %v2723 = vpop.f32.mrf.mxu0
      %v2724 = vadd.f32 0.0, %v2723
      %v2725 = vpop.f32.mrf.mxu0
      %2726 = vdwg.mxu0
      %v2727 = vadd.f32 %v2601, %v2697
      %v2728 = vadd.f32 %v2602, %v2700
      %v2729 = vadd.f32 %v2603, %v2705
      %v2730 = vadd.f32 %v2604, %v2708
      %v2731 = vadd.f32 %v2605, %v2713
      %v2732 = vadd.f32 %v2606, %v2716
      %v2733 = vadd.f32 %v2607, %v2721
      %v2734 = vadd.f32 %v2608, %v2724
      %v2735 = vld [vmem:[%s5] sm:$0x1]
      %v2737 = vlaneseq
      %v2738 = vshrl.u32 %v2737, 7
      %v2739 = vsub.s32 0, %v2738
      %v2740 = vrot.slane %v2735, %v2739
      %v2742 = vadd.f32 %v2727, %v2740
      %v2743 = vadd.f32 %v2728, %v2740
      %v2744 = vadd.f32 %v2729, %v2740
      %v2745 = vadd.f32 %v2730, %v2740
      %v2746 = vadd.f32 %v2731, %v2740
      %v2747 = vadd.f32 %v2732, %v2740
      %v2748 = vadd.f32 %v2733, %v2740
      %v2749 = vadd.f32 %v2734, %v2740
      %2750 = vst.msk [vmem:[%s251] sm:$0xff] %vm1451, %v2742
      %2751 = vst.msk [vmem:[%s251 + $0x8] sm:$0xff] %vm1451, %v2743
      %2752 = vst.msk [vmem:[%s251 + $0x10] sm:$0xff] %vm1451, %v2744
      %2753 = vst.msk [vmem:[%s251 + $0x18] sm:$0xff] %vm1451, %v2745
      %2754 = vst.msk [vmem:[%s251 + $0x20] sm:$0xff] %vm1451, %v2746
      %2755 = vst.msk [vmem:[%s251 + $0x28] sm:$0xff] %vm1451, %v2747
      %2756 = vst.msk [vmem:[%s251 + $0x30] sm:$0xff] %vm1451, %v2748
      %2757 = vst.msk [vmem:[%s251 + $0x38] sm:$0xff] %vm1451, %v2749
      %p2758 = scmp.lt.s32.totalorder %s17, 1
      %s2759 = scalar_select %p2758, %s17, 1
      %s2760 = smul.addr %s2759, 8
      %s2761 = smul.addr %s2760, 8
      %s2762 = scalar_lea.vmem %s6, %s2761
      // Predicated region
      $region45: #{basic_res_block.1} parent=43 // pred_check
        %p2763 = pneg %p166
      $region46: #{basic_res_block.1} parent=43 // pred_check_branch
        %2765 = sbr.rel (%p2763) target = $region48
      $region47: #{basic_res_block.1} parent=43 // pred_region
        _
      $region48: #{basic_res_block.1} parent=43 // pred_fallthru
        _
    $region44: #{basic_res_block.1} parent=5 // pred_fallthru
      _
    %p2766 = scmp.le.s32.totalorder 2, %s12
    // Predicated region
    $region49: #{basic_res_block.1} parent=5 // pred_check
      %p2767 = pneg %p2766
    $region50: #{basic_res_block.1} parent=5 // pred_check_branch
      %2769 = sbr.rel (%p2767) target = $region52
    $region51: #{basic_res_block.1} parent=5 // pred_region
      %s2770 = ssub.s32 %s12, 2
      // Predicated region
      $region53: #{basic_res_block.1} parent=51 // pred_check
        %p2771 = pneg %p172
      $region54: #{basic_res_block.1} parent=51 // pred_check_branch
        %2773 = sbr.rel (%p2771) target = $region56
      $region55: #{basic_res_block.1} parent=51 // pred_region
        %p2774 = scmp.lt.s32.totalorder %s18, 1
        %s2775 = scalar_select %p2774, %s18, 1
        %s2776 = smul.addr %s2775, 8
        %s2777 = smul.addr %s2776, 8
        %s2778 = scalar_lea.vmem %s6, %s2777
      $region56: #{basic_res_block.1} parent=51 // pred_fallthru
        _
    $region52: #{basic_res_block.1} parent=5 // pred_fallthru
      _
  $region6: #{basic_res_block.1} parent=0 // loop_footer
    %s16 = sadd.s32 1, %s12
  $region7: #{basic_res_block.1} parent=0 // loop_footer_branch
    %11 = sbr.rel target = $region3
  $region8: #{basic_res_block.1} parent=0 // loop_exit
    _

</llo_original>
